<compile_context>
chip_gen: v7x
topology: tpu7x:2x2x1
jax: 0.10.0
libtpu: 0.0.40
codegen_flags: <defaults>
</compile_context>

<pallas_src>
import functools

import jax
import jax.numpy as jnp
import numpy as np
from jax.experimental import pallas as pl
from jax.experimental.pallas import tpu as pltpu


def _silu(v):
    # exp -> EUP, approx reciprocal -> EUP; keeps the epilogue off the VPU divide.
    return v * pl.reciprocal(1.0 + jnp.exp(-v), approx=True)


def _bottleneck_kernel(x_ref, w1_ref, s1_ref, b1_ref, w2_ref, s2_ref, b2_ref,
                       o_ref, cat_ref, *, H, W, add_identity):
    HW, _ = x_ref.shape
    hid = w1_ref.shape[1]

    x_f32 = x_ref[...]                                            # (HW, Cin) f32

    # ---- conv1: 1x1 conv == channel matmul (bf16 MXU, f32 acc) + BN + SiLU ----
    h = jnp.dot(x_f32.astype(jnp.bfloat16), w1_ref[...],
                preferred_element_type=jnp.float32)
    h = _silu(h * s1_ref[...] + b1_ref[...])                      # (HW, hid) f32

    # Column (x) position of every flattened row, for the dx edge masks.
    xcol = jax.lax.broadcasted_iota(jnp.int32, (H, W, hid), 1).reshape(HW, hid)
    zero = jnp.zeros_like(h)
    h_l = jnp.where(xcol == W - 1, zero, h)   # dx=0 block: reads h[y, x-1]
    h_r = jnp.where(xcol == 0, zero, h)       # dx=2 block: reads h[y, x+1]

    # ---- padded scratch for conv2 --------------------------------------------
    # Zero only the pad borders (+1 extra row each side not covered by the
    # offset stores); the interior is fully overwritten every iteration.
    cat_ref[0:W + 1, :] = jnp.zeros((W + 1, 3 * hid), jnp.float32)
    cat_ref[(H + 1) * W - 1:(H + 2) * W, :] = jnp.zeros((W + 1, 3 * hid),
                                                        jnp.float32)

    # Three dx-shifted copies realized as row-offset stores (3 stores instead of
    # 9 sublane-unaligned tap slices).  Lane blocks: [0:hid]=dx0, [hid:2h]=dx1,
    # [2h:3h]=dx2; K order (dx, ci) matches w2 reshaped to (ky, kx*ci, co).
    cat_ref[W + 1:W + 1 + HW, 0:hid] = h_l
    cat_ref[W:W + HW, hid:2 * hid] = h
    cat_ref[W - 1:W - 1 + HW, 2 * hid:3 * hid] = h_r

    # ---- conv2: 3x3 conv (pad=1) as 3 matmuls with K = 3*hid ------------------
    # dy taps are row-offset slices (sublane-aligned when W % 8 == 0).
    acc = jnp.dot(cat_ref[0:HW, :].astype(jnp.bfloat16), w2_ref[0],
                  preferred_element_type=jnp.float32)
    acc = acc + jnp.dot(cat_ref[W:W + HW, :].astype(jnp.bfloat16), w2_ref[1],
                        preferred_element_type=jnp.float32)
    acc = acc + jnp.dot(cat_ref[2 * W:2 * W + HW, :].astype(jnp.bfloat16),
                        w2_ref[2], preferred_element_type=jnp.float32)

    out = _silu(acc * s2_ref[...] + b2_ref[...])

    # ---- optional residual -----------------------------------------------------
    if add_identity:
        out = out + x_f32

    o_ref[...] = out.astype(o_ref.dtype)


def darknet_bottleneck(x_nchw, params, add_identity=True):
    """Forward pass of DarknetBottleneck. x_nchw: (N, C_in, H, W) float32."""
    w1, s1, b1, w2, s2, b2 = params
    x = jnp.transpose(x_nchw, (0, 2, 3, 1)).astype(jnp.float32)   # NHWC
    N, H, W, Cin = x.shape
    hid = w1.shape[1]
    Cout = w2.shape[3]
    add_identity = add_identity and (Cin == Cout)

    x_flat = x.reshape(N, H * W, Cin)
    w1b = w1.astype(jnp.bfloat16)                                  # (Cin, hid)
    w2b = w2.reshape(3, 3 * hid, Cout).astype(jnp.bfloat16)        # (ky, kx*ci, co)

    out_flat = pl.pallas_call(
        functools.partial(_bottleneck_kernel, H=H, W=W,
                          add_identity=add_identity),
        out_shape=jax.ShapeDtypeStruct((N, H * W, Cout), jnp.float32),
        grid_spec=pltpu.PrefetchScalarGridSpec(
            num_scalar_prefetch=0,
            grid=(N,),
            in_specs=[
                pl.BlockSpec((pl.Squeezed(), H * W, Cin), lambda n: (n, 0, 0)),
                pl.BlockSpec((Cin, hid), lambda n: (0, 0)),
                pl.BlockSpec((1, hid), lambda n: (0, 0)),
                pl.BlockSpec((1, hid), lambda n: (0, 0)),
                pl.BlockSpec((3, 3 * hid, Cout), lambda n: (0, 0, 0)),
                pl.BlockSpec((1, Cout), lambda n: (0, 0)),
                pl.BlockSpec((1, Cout), lambda n: (0, 0)),
            ],
            out_specs=pl.BlockSpec((pl.Squeezed(), H * W, Cout),
                                   lambda n: (n, 0, 0)),
            scratch_shapes=[pltpu.VMEM(((H + 2) * W, 3 * hid), jnp.float32)],
        ),
        compiler_params=pltpu.CompilerParams(dimension_semantics=("parallel",)),
    )(x_flat, w1b, s1, b1, w2b, s2, b2)

    return jnp.transpose(out_flat.reshape(N, H, W, Cout), (0, 3, 1, 2))


def init_params(key, in_channels, out_channels, expansion=0.5, eps=1e-3):
    """Deterministic synthetic parameters. BN folded to per-channel scale/bias."""
    hid = int(out_channels * expansion)
    ks = jax.random.split(key, 10)

    # conv weights: stored as (Cin, hid) and HWIO (3, 3, hid, Cout)
    w1 = jax.random.normal(ks[0], (in_channels, hid), jnp.float32) / np.sqrt(in_channels)
    w2 = jax.random.normal(ks[1], (3, 3, hid, out_channels), jnp.float32) / np.sqrt(9 * hid)

    g1 = 1.0 + 0.1 * jax.random.normal(ks[2], (hid,), jnp.float32)
    beta1 = 0.1 * jax.random.normal(ks[3], (hid,), jnp.float32)
    mean1 = 0.1 * jax.random.normal(ks[4], (hid,), jnp.float32)
    var1 = jnp.abs(1.0 + 0.1 * jax.random.normal(ks[5], (hid,), jnp.float32))

    g2 = 1.0 + 0.1 * jax.random.normal(ks[6], (out_channels,), jnp.float32)
    beta2 = 0.1 * jax.random.normal(ks[7], (out_channels,), jnp.float32)
    mean2 = 0.1 * jax.random.normal(ks[8], (out_channels,), jnp.float32)
    var2 = jnp.abs(1.0 + 0.1 * jax.random.normal(ks[9], (out_channels,), jnp.float32))

    s1 = (g1 / jnp.sqrt(var1 + eps)).reshape(1, hid)
    b1 = (beta1 - mean1 * g1 / jnp.sqrt(var1 + eps)).reshape(1, hid)
    s2 = (g2 / jnp.sqrt(var2 + eps)).reshape(1, out_channels)
    b2 = (beta2 - mean2 * g2 / jnp.sqrt(var2 + eps)).reshape(1, out_channels)
    return (w1, s1, b1, w2, s2, b2)


def reference(x_nchw, params, add_identity=True):
    """Plain-JAX reference mirroring the kernel's bf16-matmul / f32-epilogue."""
    w1, s1, b1, w2, s2, b2 = params
    x = jnp.transpose(x_nchw, (0, 2, 3, 1)).astype(jnp.float32)

    def bf(a):
        return a.astype(jnp.bfloat16).astype(jnp.float32)

    dn = ("NHWC", "HWIO", "NHWC")
    h = jax.lax.conv_general_dilated(bf(x), bf(w1)[None, None], (1, 1), "VALID",
                                     dimension_numbers=dn,
                                     precision=jax.lax.Precision.HIGHEST)
    h = h * s1 + b1
    h = h * jax.nn.sigmoid(h)
    o = jax.lax.conv_general_dilated(bf(h), bf(w2), (1, 1), "SAME",
                                     dimension_numbers=dn,
                                     precision=jax.lax.Precision.HIGHEST)
    o = o * s2 + b2
    o = o * jax.nn.sigmoid(o)
    if add_identity and x.shape[-1] == o.shape[-1]:
        o = o + x
    return jnp.transpose(o, (0, 3, 1, 2))


if __name__ == "__main__":
    key = jax.random.PRNGKey(0)
    kx, kp = jax.random.split(key)

    N, C, H, W = 2, 4, 16, 16          # in_channels == out_channels -> identity add
    x = jax.random.normal(kx, (N, C, H, W), jnp.float32)
    params = init_params(kp, C, C, expansion=0.5)

    out = darknet_bottleneck(x, params, add_identity=True)
    out = jax.block_until_ready(out)
    assert out.shape == (N, C, H, W) and out.dtype == jnp.float32

    ref = reference(x, params, add_identity=True)
    max_diff = float(jnp.max(jnp.abs(out - ref)))
    if max_diff > 5e-2:
        raise RuntimeError(f"kernel mismatch vs reference, max|diff|={max_diff}")

    print("KERNEL_OK")
</pallas_src>

<mosaic_0001>
module attributes {stable_mosaic.version = 11 : i64} {
  func.func @_bottleneck_kernel(%arg0: i32, %arg1: memref<1x256x4xf32, #tpu.memory_space<vmem>>, %arg2: memref<4x2xbf16, #tpu.memory_space<vmem>>, %arg3: memref<1x2xf32, #tpu.memory_space<vmem>>, %arg4: memref<1x2xf32, #tpu.memory_space<vmem>>, %arg5: memref<3x6x4xbf16, #tpu.memory_space<vmem>>, %arg6: memref<1x4xf32, #tpu.memory_space<vmem>>, %arg7: memref<1x4xf32, #tpu.memory_space<vmem>>, %arg8: memref<1x256x4xf32, #tpu.memory_space<vmem>>, %arg9: memref<288x6xf32, #tpu.memory_space<vmem>>) attributes {dimension_semantics = [#tpu.dimension_semantics<parallel>], iteration_bounds = array<i64: 2>, scalar_prefetch = 0 : i64, scratch_operands = 1 : i64, tpu.core_type = #tpu.core_type<tc>, window_params = [{transform_indices = @transform_0, window_bounds = array<i64: 1, 256, 4>}, {pipeline_mode = #tpu.pipeline_mode<synchronous>, transform_indices = @transform_1, window_bounds = array<i64: 4, 2>}, {pipeline_mode = #tpu.pipeline_mode<synchronous>, transform_indices = @transform_2, window_bounds = array<i64: 1, 2>}, {pipeline_mode = #tpu.pipeline_mode<synchronous>, transform_indices = @transform_3, window_bounds = array<i64: 1, 2>}, {pipeline_mode = #tpu.pipeline_mode<synchronous>, transform_indices = @transform_4, window_bounds = array<i64: 3, 6, 4>}, {pipeline_mode = #tpu.pipeline_mode<synchronous>, transform_indices = @transform_5, window_bounds = array<i64: 1, 4>}, {pipeline_mode = #tpu.pipeline_mode<synchronous>, transform_indices = @transform_6, window_bounds = array<i64: 1, 4>}, {transform_indices = @transform_7, window_bounds = array<i64: 1, 256, 4>}]} {
    %c0 = arith.constant 0 : index
    %c0_0 = arith.constant 0 : index
    %c0_1 = arith.constant 0 : index
    %0 = vector.load %arg1[%c0, %c0_0, %c0_1] : memref<1x256x4xf32, #tpu.memory_space<vmem>>, vector<1x256x4xf32>
    %1 = vector.shape_cast %0 : vector<1x256x4xf32> to vector<256x4xf32>
    %2 = arith.truncf %1 : vector<256x4xf32> to vector<256x4xbf16>
    %c0_2 = arith.constant 0 : index
    %c0_3 = arith.constant 0 : index
    %3 = vector.load %arg2[%c0_2, %c0_3] : memref<4x2xbf16, #tpu.memory_space<vmem>>, vector<4x2xbf16>
    %cst = arith.constant dense<0.000000e+00> : vector<256x2xf32>
    %4 = tpu.matmul %2, %3, %cst {dimension_numbers = #tpu.dot_dimension_numbers<[1], [0], [0], [1], [0, 0, 1, 1], [], []>} : vector<256x4xbf16>, vector<4x2xbf16>, vector<256x2xf32> -> vector<256x2xf32>
    %c0_4 = arith.constant 0 : index
    %c0_5 = arith.constant 0 : index
    %5 = vector.load %arg3[%c0_4, %c0_5] : memref<1x2xf32, #tpu.memory_space<vmem>>, vector<1x2xf32>
    %6 = vector.broadcast %5 : vector<1x2xf32> to vector<256x2xf32>
    %7 = arith.mulf %4, %6 : vector<256x2xf32>
    %c0_6 = arith.constant 0 : index
    %c0_7 = arith.constant 0 : index
    %8 = vector.load %arg4[%c0_6, %c0_7] : memref<1x2xf32, #tpu.memory_space<vmem>>, vector<1x2xf32>
    %9 = vector.broadcast %8 : vector<1x2xf32> to vector<256x2xf32>
    %10 = arith.addf %7, %9 : vector<256x2xf32>
    %cst_8 = arith.constant 0.000000e+00 : f32
    %11 = vector.broadcast %cst_8 : f32 to vector<256x2xf32>
    %12 = arith.subf %11, %10 : vector<256x2xf32>
    %13 = math.exp %12 : vector<256x2xf32>
    %cst_9 = arith.constant 1.000000e+00 : f32
    %14 = vector.broadcast %cst_9 : f32 to vector<256x2xf32>
    %15 = arith.addf %14, %13 : vector<256x2xf32>
    %16 = tpu.reciprocal %15 {approx = true} : vector<256x2xf32> -> vector<256x2xf32>
    %17 = arith.mulf %10, %16 : vector<256x2xf32>
    %18 = tpu.iota {dimensions = array<i32: 1>} : vector<16x16x2xi32>
    %19 = vector.shape_cast %18 : vector<16x16x2xi32> to vector<256x2xi32>
    %cst_10 = arith.constant 0.000000e+00 : f32
    %20 = vector.broadcast %cst_10 : f32 to vector<256x2xf32>
    %c15_i32 = arith.constant 15 : i32
    %21 = vector.broadcast %c15_i32 : i32 to vector<256x2xi32>
    %22 = arith.cmpi eq, %19, %21 : vector<256x2xi32>
    %23 = arith.select %22, %20, %17 : vector<256x2xi1>, vector<256x2xf32>
    %c0_i32 = arith.constant 0 : i32
    %24 = vector.broadcast %c0_i32 : i32 to vector<256x2xi32>
    %25 = arith.cmpi eq, %19, %24 : vector<256x2xi32>
    %26 = arith.select %25, %20, %17 : vector<256x2xi1>, vector<256x2xf32>
    %cst_11 = arith.constant 0.000000e+00 : f32
    %27 = vector.broadcast %cst_11 : f32 to vector<17x6xf32>
    %c0_12 = arith.constant 0 : index
    %c0_13 = arith.constant 0 : index
    %28 = vector.load %arg9[%c0_12, %c0_13] : memref<288x6xf32, #tpu.memory_space<vmem>>, vector<17x6xf32>
    tpu.vector_store %arg9[%c0_12, %c0_13], %27 {strides = array<i32>} : memref<288x6xf32, #tpu.memory_space<vmem>>, vector<17x6xf32>,
    %cst_14 = arith.constant 0.000000e+00 : f32
    %29 = vector.broadcast %cst_14 : f32 to vector<17x6xf32>
    %c271 = arith.constant 271 : index
    %c0_15 = arith.constant 0 : index
    %30 = vector.load %arg9[%c271, %c0_15] : memref<288x6xf32, #tpu.memory_space<vmem>>, vector<17x6xf32>
    tpu.vector_store %arg9[%c271, %c0_15], %29 {strides = array<i32>} : memref<288x6xf32, #tpu.memory_space<vmem>>, vector<17x6xf32>,
    %c17 = arith.constant 17 : index
    %c0_16 = arith.constant 0 : index
    %31 = vector.load %arg9[%c17, %c0_16] : memref<288x6xf32, #tpu.memory_space<vmem>>, vector<256x2xf32>
    tpu.vector_store %arg9[%c17, %c0_16], %23 {strides = array<i32>} : memref<288x6xf32, #tpu.memory_space<vmem>>, vector<256x2xf32>,
    %c16 = arith.constant 16 : index
    %c2 = arith.constant 2 : index
    %32 = vector.load %arg9[%c16, %c2] : memref<288x6xf32, #tpu.memory_space<vmem>>, vector<256x2xf32>
    tpu.vector_store %arg9[%c16, %c2], %17 {strides = array<i32>} : memref<288x6xf32, #tpu.memory_space<vmem>>, vector<256x2xf32>,
    %c15 = arith.constant 15 : index
    %c4 = arith.constant 4 : index
    %33 = vector.load %arg9[%c15, %c4] : memref<288x6xf32, #tpu.memory_space<vmem>>, vector<256x2xf32>
    tpu.vector_store %arg9[%c15, %c4], %26 {strides = array<i32>} : memref<288x6xf32, #tpu.memory_space<vmem>>, vector<256x2xf32>,
    %c0_17 = arith.constant 0 : index
    %c0_18 = arith.constant 0 : index
    %34 = vector.load %arg9[%c0_17, %c0_18] : memref<288x6xf32, #tpu.memory_space<vmem>>, vector<256x6xf32>
    %35 = arith.truncf %34 : vector<256x6xf32> to vector<256x6xbf16>
    %c0_19 = arith.constant 0 : index
    %c0_20 = arith.constant 0 : index
    %c0_21 = arith.constant 0 : index
    %36 = vector.load %arg5[%c0_19, %c0_20, %c0_21] : memref<3x6x4xbf16, #tpu.memory_space<vmem>>, vector<1x6x4xbf16>
    %37 = vector.shape_cast %36 : vector<1x6x4xbf16> to vector<6x4xbf16>
    %cst_22 = arith.constant dense<0.000000e+00> : vector<256x4xf32>
    %38 = tpu.matmul %35, %37, %cst_22 {dimension_numbers = #tpu.dot_dimension_numbers<[1], [0], [0], [1], [0, 0, 1, 1], [], []>} : vector<256x6xbf16>, vector<6x4xbf16>, vector<256x4xf32> -> vector<256x4xf32>
    %c16_23 = arith.constant 16 : index
    %c0_24 = arith.constant 0 : index
    %39 = vector.load %arg9[%c16_23, %c0_24] : memref<288x6xf32, #tpu.memory_space<vmem>>, vector<256x6xf32>
    %40 = arith.truncf %39 : vector<256x6xf32> to vector<256x6xbf16>
    %c1 = arith.constant 1 : index
    %c0_25 = arith.constant 0 : index
    %c0_26 = arith.constant 0 : index
    %41 = vector.load %arg5[%c1, %c0_25, %c0_26] : memref<3x6x4xbf16, #tpu.memory_space<vmem>>, vector<1x6x4xbf16>
    %42 = vector.shape_cast %41 : vector<1x6x4xbf16> to vector<6x4xbf16>
    %cst_27 = arith.constant dense<0.000000e+00> : vector<256x4xf32>
    %43 = tpu.matmul %40, %42, %cst_27 {dimension_numbers = #tpu.dot_dimension_numbers<[1], [0], [0], [1], [0, 0, 1, 1], [], []>} : vector<256x6xbf16>, vector<6x4xbf16>, vector<256x4xf32> -> vector<256x4xf32>
    %44 = arith.addf %38, %43 : vector<256x4xf32>
    %c32 = arith.constant 32 : index
    %c0_28 = arith.constant 0 : index
    %45 = vector.load %arg9[%c32, %c0_28] : memref<288x6xf32, #tpu.memory_space<vmem>>, vector<256x6xf32>
    %46 = arith.truncf %45 : vector<256x6xf32> to vector<256x6xbf16>
    %c2_29 = arith.constant 2 : index
    %c0_30 = arith.constant 0 : index
    %c0_31 = arith.constant 0 : index
    %47 = vector.load %arg5[%c2_29, %c0_30, %c0_31] : memref<3x6x4xbf16, #tpu.memory_space<vmem>>, vector<1x6x4xbf16>
    %48 = vector.shape_cast %47 : vector<1x6x4xbf16> to vector<6x4xbf16>
    %cst_32 = arith.constant dense<0.000000e+00> : vector<256x4xf32>
    %49 = tpu.matmul %46, %48, %cst_32 {dimension_numbers = #tpu.dot_dimension_numbers<[1], [0], [0], [1], [0, 0, 1, 1], [], []>} : vector<256x6xbf16>, vector<6x4xbf16>, vector<256x4xf32> -> vector<256x4xf32>
    %50 = arith.addf %44, %49 : vector<256x4xf32>
    %c0_33 = arith.constant 0 : index
    %c0_34 = arith.constant 0 : index
    %51 = vector.load %arg6[%c0_33, %c0_34] : memref<1x4xf32, #tpu.memory_space<vmem>>, vector<1x4xf32>
    %52 = vector.broadcast %51 : vector<1x4xf32> to vector<256x4xf32>
    %53 = arith.mulf %50, %52 : vector<256x4xf32>
    %c0_35 = arith.constant 0 : index
    %c0_36 = arith.constant 0 : index
    %54 = vector.load %arg7[%c0_35, %c0_36] : memref<1x4xf32, #tpu.memory_space<vmem>>, vector<1x4xf32>
    %55 = vector.broadcast %54 : vector<1x4xf32> to vector<256x4xf32>
    %56 = arith.addf %53, %55 : vector<256x4xf32>
    %cst_37 = arith.constant 0.000000e+00 : f32
    %57 = vector.broadcast %cst_37 : f32 to vector<256x4xf32>
    %58 = arith.subf %57, %56 : vector<256x4xf32>
    %59 = math.exp %58 : vector<256x4xf32>
    %cst_38 = arith.constant 1.000000e+00 : f32
    %60 = vector.broadcast %cst_38 : f32 to vector<256x4xf32>
    %61 = arith.addf %60, %59 : vector<256x4xf32>
    %62 = tpu.reciprocal %61 {approx = true} : vector<256x4xf32> -> vector<256x4xf32>
    %63 = arith.mulf %56, %62 : vector<256x4xf32>
    %64 = arith.addf %63, %1 : vector<256x4xf32>
    %c0_39 = arith.constant 0 : index
    %c0_40 = arith.constant 0 : index
    %c0_41 = arith.constant 0 : index
    %65 = vector.load %arg8[%c0_39, %c0_40, %c0_41] : memref<1x256x4xf32, #tpu.memory_space<vmem>>, vector<1x256x4xf32>
    %66 = vector.shape_cast %65 : vector<1x256x4xf32> to vector<256x4xf32>
    %67 = vector.shape_cast %64 : vector<256x4xf32> to vector<1x256x4xf32>
    tpu.vector_store %arg8[%c0_39, %c0_40, %c0_41], %67 {strides = array<i32>} : memref<1x256x4xf32, #tpu.memory_space<vmem>>, vector<1x256x4xf32>,
    return
  }
  func.func @transform_0(%arg0: i32) -> (i32, i32, i32) {
    %c0_i32 = arith.constant 0 : i32
    %c0_i32_0 = arith.constant 0 : i32
    %c0_i32_1 = arith.constant 0 : i32
    return %arg0, %c0_i32, %c0_i32_0 : i32, i32, i32
  }
  func.func @transform_1(%arg0: i32) -> (i32, i32) {
    %c0_i32 = arith.constant 0 : i32
    %c0_i32_0 = arith.constant 0 : i32
    %c0_i32_1 = arith.constant 0 : i32
    return %c0_i32, %c0_i32_0 : i32, i32
  }
  func.func @transform_2(%arg0: i32) -> (i32, i32) {
    %c0_i32 = arith.constant 0 : i32
    %c0_i32_0 = arith.constant 0 : i32
    %c0_i32_1 = arith.constant 0 : i32
    return %c0_i32, %c0_i32_0 : i32, i32
  }
  func.func @transform_3(%arg0: i32) -> (i32, i32) {
    %c0_i32 = arith.constant 0 : i32
    %c0_i32_0 = arith.constant 0 : i32
    %c0_i32_1 = arith.constant 0 : i32
    return %c0_i32, %c0_i32_0 : i32, i32
  }
  func.func @transform_4(%arg0: i32) -> (i32, i32, i32) {
    %c0_i32 = arith.constant 0 : i32
    %c0_i32_0 = arith.constant 0 : i32
    %c0_i32_1 = arith.constant 0 : i32
    %c0_i32_2 = arith.constant 0 : i32
    return %c0_i32, %c0_i32_0, %c0_i32_1 : i32, i32, i32
  }
  func.func @transform_5(%arg0: i32) -> (i32, i32) {
    %c0_i32 = arith.constant 0 : i32
    %c0_i32_0 = arith.constant 0 : i32
    %c0_i32_1 = arith.constant 0 : i32
    return %c0_i32, %c0_i32_0 : i32, i32
  }
  func.func @transform_6(%arg0: i32) -> (i32, i32) {
    %c0_i32 = arith.constant 0 : i32
    %c0_i32_0 = arith.constant 0 : i32
    %c0_i32_1 = arith.constant 0 : i32
    return %c0_i32, %c0_i32_0 : i32, i32
  }
  func.func @transform_7(%arg0: i32) -> (i32, i32, i32) {
    %c0_i32 = arith.constant 0 : i32
    %c0_i32_0 = arith.constant 0 : i32
    %c0_i32_1 = arith.constant 0 : i32
    return %arg0, %c0_i32, %c0_i32_0 : i32, i32, i32
  }
}

</mosaic_0001>

<llo_original>
// kernel: tpu_custom_call.1
$region0: #{tpu_custom_call.1}
  #allocation0 [shape = 'u32[]', space=smem, size = 0x4, offset = 0x4, fixed_abs, tag = 'smem constant byte address 0x4 - core index']
  #allocation1 [shape = 'u32[144,128]{1,0:T(1,128)}', space=vmem, size = 0x12000, scoped, tag = 'internal scratch']
  #allocation2 [shape = 'f32[288,6]{1,0:T(8,128)}', space=vmem, size = 0x24000, scoped, tag = 'scratch operand']
  %s0 = inlined_call_operand.vmem [shape: f32[2,256,4], index: 0, kind: input, shape index: {}]
  %s1 = inlined_call_operand.vmem [shape: bf16[4,2], index: 1, kind: input, shape index: {}]
  %s2 = inlined_call_operand.vmem [shape: f32[1,2], index: 2, kind: input, shape index: {}]
  %s3 = inlined_call_operand.vmem [shape: f32[1,2], index: 3, kind: input, shape index: {}]
  %s4 = inlined_call_operand.vmem [shape: bf16[3,6,4], index: 4, kind: input, shape index: {}]
  %s5 = inlined_call_operand.vmem [shape: f32[1,4], index: 5, kind: input, shape index: {}]
  %s6 = inlined_call_operand.vmem [shape: f32[1,4], index: 6, kind: input, shape index: {}]
  %s7 = inlined_call_operand.vmem [shape: f32[2,256,4], index: 7, kind: output, shape index: {}]
  %s8 = sld [smem:[#allocation0]]
  $region61: #{tpu_custom_call.1} parent=0
    _
  %s10 = ssub.s32 1, %s8
  %s11 = scalar_select 0, %s10, %s8
  loop: start=0, step=1, limit=4
  $region2: #{tpu_custom_call.1} parent=0 // loop_pre_header
    _
  $region3: #{tpu_custom_call.1} parent=0 // loop_header
    %s13 = sphi 0, %s17
    %p14 = scmp.ge.s32.totalorder %s13, 4
    %s23 = sphi 0, %s25
    %s26 = sphi 0, %s23
    %s27 = sphi 0, %s26
    %s43 = sphi 0, %s27
    %s47 = sphi 0, %s47
    %s49 = sphi 0, %s47
    %s50 = sphi 0, %s49
    %s64 = sphi 0, %s50
    %s68 = sphi 0, %s68
    %s70 = sphi 0, %s68
    %s71 = sphi 0, %s70
    %s85 = sphi 0, %s71
    %s89 = sphi 0, %s89
    %s91 = sphi 0, %s89
    %s92 = sphi 0, %s91
    %s106 = sphi 0, %s92
    %s110 = sphi 0, %s110
    %s112 = sphi 0, %s110
    %s113 = sphi 0, %s112
    %s127 = sphi 0, %s113
    %s131 = sphi 0, %s131
    %s133 = sphi 0, %s131
    %s134 = sphi 0, %s133
    %s148 = sphi 0, %s134
    %s152 = sphi 0, %s152
    %s154 = sphi 0, %s152
    %s155 = sphi 0, %s154
    %s169 = sphi 0, %s155
    %s175 = sphi 0, %s177
    %s178 = sphi 0, %s175
    %s179 = sphi 0, %s178
    %s195 = sphi 0, %s179
  $region4: #{tpu_custom_call.1} parent=0 // loop_header_branch
    %16 = sbr.rel (%p14) target = $region8
  $region5: #{tpu_custom_call.1} parent=0 // loop_body
    %s18 = ssub.s32 %s13, 1
    %s19 = ssub.s32 %s13, 2
    %s20 = sadd.s32 %s13, 1
    %s21 = ssub.s32 %s13, %s20
    %p22 = scmp.eq.s32.totalorder %s21, 0
    %s24 = sadd.s32 %s23, 1
    %s25 = scalar_select %p22, %s23, %s24
    %p28 = pneg %p22
    %p29 = scmp.eq.s32.totalorder %s13, 1
    %p30 = por %p28, %p29
    %p31 = scmp.ne.s32.totalorder %s23, %s26
    %p32 = scmp.eq.s32.totalorder %s13, 0
    %p33 = por %p31, %p32
    %p34 = scmp.ne.s32.totalorder %s23, %s26
    %p35 = scmp.eq.s32.totalorder %s18, 1
    %p36 = por %p34, %p35
    %p37 = scmp.ne.s32.totalorder %s26, %s27
    %p38 = scmp.eq.s32.totalorder %s18, 0
    %p39 = por %p37, %p38
    %p40 = scmp.ne.s32.totalorder %s26, %s27
    %p41 = scmp.eq.s32.totalorder %s19, 1
    %p42 = por %p40, %p41
    %p44 = scmp.ne.s32.totalorder %s27, %s43
    %p45 = scmp.eq.s32.totalorder %s19, 0
    %p46 = por %p44, %p45
    %s48 = sadd.s32 %s47, 1
    %p51 = scmp.eq.s32.totalorder %s13, 1
    %p52 = scmp.ne.s32.totalorder %s47, %s49
    %p53 = scmp.eq.s32.totalorder %s13, 0
    %p54 = por %p52, %p53
    %p55 = scmp.ne.s32.totalorder %s47, %s49
    %p56 = scmp.eq.s32.totalorder %s18, 1
    %p57 = por %p55, %p56
    %p58 = scmp.ne.s32.totalorder %s49, %s50
    %p59 = scmp.eq.s32.totalorder %s18, 0
    %p60 = por %p58, %p59
    %p61 = scmp.ne.s32.totalorder %s49, %s50
    %p62 = scmp.eq.s32.totalorder %s19, 1
    %p63 = por %p61, %p62
    %p65 = scmp.ne.s32.totalorder %s50, %s64
    %p66 = scmp.eq.s32.totalorder %s19, 0
    %p67 = por %p65, %p66
    %s69 = sadd.s32 %s68, 1
    %p72 = scmp.eq.s32.totalorder %s13, 1
    %p73 = scmp.ne.s32.totalorder %s68, %s70
    %p74 = scmp.eq.s32.totalorder %s13, 0
    %p75 = por %p73, %p74
    %p76 = scmp.ne.s32.totalorder %s68, %s70
    %p77 = scmp.eq.s32.totalorder %s18, 1
    %p78 = por %p76, %p77
    %p79 = scmp.ne.s32.totalorder %s70, %s71
    %p80 = scmp.eq.s32.totalorder %s18, 0
    %p81 = por %p79, %p80
    %p82 = scmp.ne.s32.totalorder %s70, %s71
    %p83 = scmp.eq.s32.totalorder %s19, 1
    %p84 = por %p82, %p83
    %p86 = scmp.ne.s32.totalorder %s71, %s85
    %p87 = scmp.eq.s32.totalorder %s19, 0
    %p88 = por %p86, %p87
    %s90 = sadd.s32 %s89, 1
    %p93 = scmp.eq.s32.totalorder %s13, 1
    %p94 = scmp.ne.s32.totalorder %s89, %s91
    %p95 = scmp.eq.s32.totalorder %s13, 0
    %p96 = por %p94, %p95
    %p97 = scmp.ne.s32.totalorder %s89, %s91
    %p98 = scmp.eq.s32.totalorder %s18, 1
    %p99 = por %p97, %p98
    %p100 = scmp.ne.s32.totalorder %s91, %s92
    %p101 = scmp.eq.s32.totalorder %s18, 0
    %p102 = por %p100, %p101
    %p103 = scmp.ne.s32.totalorder %s91, %s92
    %p104 = scmp.eq.s32.totalorder %s19, 1
    %p105 = por %p103, %p104
    %p107 = scmp.ne.s32.totalorder %s92, %s106
    %p108 = scmp.eq.s32.totalorder %s19, 0
    %p109 = por %p107, %p108
    %s111 = sadd.s32 %s110, 1
    %p114 = scmp.eq.s32.totalorder %s13, 1
    %p115 = scmp.ne.s32.totalorder %s110, %s112
    %p116 = scmp.eq.s32.totalorder %s13, 0
    %p117 = por %p115, %p116
    %p118 = scmp.ne.s32.totalorder %s110, %s112
    %p119 = scmp.eq.s32.totalorder %s18, 1
    %p120 = por %p118, %p119
    %p121 = scmp.ne.s32.totalorder %s112, %s113
    %p122 = scmp.eq.s32.totalorder %s18, 0
    %p123 = por %p121, %p122
    %p124 = scmp.ne.s32.totalorder %s112, %s113
    %p125 = scmp.eq.s32.totalorder %s19, 1
    %p126 = por %p124, %p125
    %p128 = scmp.ne.s32.totalorder %s113, %s127
    %p129 = scmp.eq.s32.totalorder %s19, 0
    %p130 = por %p128, %p129
    %s132 = sadd.s32 %s131, 1
    %p135 = scmp.eq.s32.totalorder %s13, 1
    %p136 = scmp.ne.s32.totalorder %s131, %s133
    %p137 = scmp.eq.s32.totalorder %s13, 0
    %p138 = por %p136, %p137
    %p139 = scmp.ne.s32.totalorder %s131, %s133
    %p140 = scmp.eq.s32.totalorder %s18, 1
    %p141 = por %p139, %p140
    %p142 = scmp.ne.s32.totalorder %s133, %s134
    %p143 = scmp.eq.s32.totalorder %s18, 0
    %p144 = por %p142, %p143
    %p145 = scmp.ne.s32.totalorder %s133, %s134
    %p146 = scmp.eq.s32.totalorder %s19, 1
    %p147 = por %p145, %p146
    %p149 = scmp.ne.s32.totalorder %s134, %s148
    %p150 = scmp.eq.s32.totalorder %s19, 0
    %p151 = por %p149, %p150
    %s153 = sadd.s32 %s152, 1
    %p156 = scmp.eq.s32.totalorder %s13, 1
    %p157 = scmp.ne.s32.totalorder %s152, %s154
    %p158 = scmp.eq.s32.totalorder %s13, 0
    %p159 = por %p157, %p158
    %p160 = scmp.ne.s32.totalorder %s152, %s154
    %p161 = scmp.eq.s32.totalorder %s18, 1
    %p162 = por %p160, %p161
    %p163 = scmp.ne.s32.totalorder %s154, %s155
    %p164 = scmp.eq.s32.totalorder %s18, 0
    %p165 = por %p163, %p164
    %p166 = scmp.ne.s32.totalorder %s154, %s155
    %p167 = scmp.eq.s32.totalorder %s19, 1
    %p168 = por %p166, %p167
    %p170 = scmp.ne.s32.totalorder %s155, %s169
    %p171 = scmp.eq.s32.totalorder %s19, 0
    %p172 = por %p170, %p171
    %s173 = ssub.s32 %s13, %s20
    %p174 = scmp.eq.s32.totalorder %s173, 0
    %s176 = sadd.s32 %s175, 1
    %s177 = scalar_select %p174, %s175, %s176
    %p180 = pneg %p174
    %p181 = scmp.eq.s32.totalorder %s13, 1
    %p182 = por %p180, %p181
    %p183 = scmp.ne.s32.totalorder %s175, %s178
    %p184 = scmp.eq.s32.totalorder %s13, 0
    %p185 = por %p183, %p184
    %p186 = scmp.ne.s32.totalorder %s175, %s178
    %p187 = scmp.eq.s32.totalorder %s18, 1
    %p188 = por %p186, %p187
    %p189 = scmp.ne.s32.totalorder %s178, %s179
    %p190 = scmp.eq.s32.totalorder %s18, 0
    %p191 = por %p189, %p190
    %p192 = scmp.ne.s32.totalorder %s178, %s179
    %p193 = scmp.eq.s32.totalorder %s19, 1
    %p194 = por %p192, %p193
    %p196 = scmp.ne.s32.totalorder %s179, %s195
    %p197 = scmp.eq.s32.totalorder %s19, 0
    %p198 = por %p196, %p197
    %p199 = scmp.le.s32.totalorder 1, %s13
    %p200 = scmp.lt.s32.totalorder %s13, 3
    %p201 = pnand %p199, %p200
    %p202 = pneg %p201
    // Predicated region
    $region9: #{tpu_custom_call.1} parent=5 // pred_check
      _
    $region10: #{tpu_custom_call.1} parent=5 // pred_check_branch
      %204 = sbr.rel (%p201) target = $region12
    $region11: #{tpu_custom_call.1} parent=5 // pred_region
      %s205 = ssub.s32 %s13, 1
      // Predicated region
      $region13: #{tpu_custom_call.1} parent=11 // pred_check
        %p206 = pneg %p60
      $region14: #{tpu_custom_call.1} parent=11 // pred_check_branch
        %208 = sbr.rel (%p206) target = $region16
      $region15: #{tpu_custom_call.1} parent=11 // pred_region
        _
      $region16: #{tpu_custom_call.1} parent=11 // pred_fallthru
        _
      // Predicated region
      $region17: #{tpu_custom_call.1} parent=11 // pred_check
        %p209 = pneg %p81
      $region18: #{tpu_custom_call.1} parent=11 // pred_check_branch
        %211 = sbr.rel (%p209) target = $region20
      $region19: #{tpu_custom_call.1} parent=11 // pred_region
        _
      $region20: #{tpu_custom_call.1} parent=11 // pred_fallthru
        _
      // Predicated region
      $region21: #{tpu_custom_call.1} parent=11 // pred_check
        %p212 = pneg %p102
      $region22: #{tpu_custom_call.1} parent=11 // pred_check_branch
        %214 = sbr.rel (%p212) target = $region24
      $region23: #{tpu_custom_call.1} parent=11 // pred_region
        _
      $region24: #{tpu_custom_call.1} parent=11 // pred_fallthru
        _
      // Predicated region
      $region25: #{tpu_custom_call.1} parent=11 // pred_check
        %p215 = pneg %p123
      $region26: #{tpu_custom_call.1} parent=11 // pred_check_branch
        %217 = sbr.rel (%p215) target = $region28
      $region27: #{tpu_custom_call.1} parent=11 // pred_region
        _
      $region28: #{tpu_custom_call.1} parent=11 // pred_fallthru
        _
      // Predicated region
      $region29: #{tpu_custom_call.1} parent=11 // pred_check
        %p218 = pneg %p144
      $region30: #{tpu_custom_call.1} parent=11 // pred_check_branch
        %220 = sbr.rel (%p218) target = $region32
      $region31: #{tpu_custom_call.1} parent=11 // pred_region
        _
      $region32: #{tpu_custom_call.1} parent=11 // pred_fallthru
        _
      // Predicated region
      $region33: #{tpu_custom_call.1} parent=11 // pred_check
        %p221 = pneg %p165
      $region34: #{tpu_custom_call.1} parent=11 // pred_check_branch
        %223 = sbr.rel (%p221) target = $region36
      $region35: #{tpu_custom_call.1} parent=11 // pred_region
        _
      $region36: #{tpu_custom_call.1} parent=11 // pred_fallthru
        _
    $region12: #{tpu_custom_call.1} parent=5 // pred_fallthru
      _
    %p224 = scmp.lt.s32.totalorder %s13, 2
    // Predicated region
    $region37: #{tpu_custom_call.1} parent=5 // pred_check
      %p225 = pneg %p224
    $region38: #{tpu_custom_call.1} parent=5 // pred_check_branch
      %227 = sbr.rel (%p225) target = $region40
    $region39: #{tpu_custom_call.1} parent=5 // pred_region
      // Predicated region
      $region41: #{tpu_custom_call.1} parent=39 // pred_check
        %p228 = pneg %p33
      $region42: #{tpu_custom_call.1} parent=39 // pred_check_branch
        %230 = sbr.rel (%p228) target = $region44
      $region43: #{tpu_custom_call.1} parent=39 // pred_region
        %p231 = scmp.lt.s32.totalorder %s13, 1
        %s232 = scalar_select %p231, %s13, 1
        %s233 = smul.addr %s232, 32
        %s234 = smul.addr %s233, 8
        %s235 = scalar_lea.vmem %s0, %s234
      $region44: #{tpu_custom_call.1} parent=39 // pred_fallthru
        _
    $region40: #{tpu_custom_call.1} parent=5 // pred_fallthru
      _
    %p236 = scmp.le.s32.totalorder 1, %s13
    %p237 = scmp.lt.s32.totalorder %s13, 3
    %p238 = pnand %p236, %p237
    %p239 = pneg %p238
    // Predicated region
    $region45: #{tpu_custom_call.1} parent=5 // pred_check
      _
    $region46: #{tpu_custom_call.1} parent=5 // pred_check_branch
      %241 = sbr.rel (%p238) target = $region48
    $region47: #{tpu_custom_call.1} parent=5 // pred_region
      %s242 = ssub.s32 %s13, 1
      %p243 = scmp.lt.s32.totalorder %s18, 1
      %s244 = scalar_select %p243, %s18, 1
      %s245 = smul.addr %s244, 32
      %s246 = smul.addr %s245, 8
      %s247 = scalar_lea.vmem %s0, %s246
      %p248 = pneg %p39
      %p249 = pneg %p36
      %p250 = pneg %p60
      %p251 = pneg %p57
      %p252 = pneg %p81
      %p253 = pneg %p78
      %p254 = pneg %p102
      %p255 = pneg %p99
      %p256 = pneg %p123
      %p257 = pneg %p120
      %p258 = pneg %p144
      %p259 = pneg %p141
      %p260 = pneg %p165
      %p261 = pneg %p162
      %p262 = pneg %p191
      %p263 = pneg %p188
      %p264 = scmp.lt.s32.totalorder %s18, 1
      %s265 = scalar_select %p264, %s18, 1
      %s266 = smul.addr %s265, 32
      %s267 = smul.addr %s266, 8
      %s268 = scalar_lea.vmem %s7, %s267
      %p269 = scmp.lt.s32.totalorder %s18, 1
      %s270 = scalar_select %p269, %s18, 1
      %s271 = smul.addr %s270, 32
      %s272 = smul.addr %s271, 8
      %s273 = scalar_lea.vmem %s0, %s272
      %p274 = scmp.lt.s32.totalorder %s18, 1
      %s275 = scalar_select %p274, %s18, 1
      %s276 = smul.addr %s275, 32
      %s277 = smul.addr %s276, 8
      %s278 = scalar_lea.vmem %s7, %s277
      %v280 = vld [vmem:[%s273] sm:$0xff]
      %v281 = vld [vmem:[%s273 + $0x8] sm:$0xff]
      %v282 = vld [vmem:[%s273 + $0x10] sm:$0xff]
      %v283 = vld [vmem:[%s273 + $0x18] sm:$0xff]
      %v284 = vld [vmem:[%s273 + $0x20] sm:$0xff]
      %v285 = vld [vmem:[%s273 + $0x28] sm:$0xff]
      %v286 = vld [vmem:[%s273 + $0x30] sm:$0xff]
      %v287 = vld [vmem:[%s273 + $0x38] sm:$0xff]
      %v288 = vld [vmem:[%s273 + $0x40] sm:$0xff]
      %v289 = vld [vmem:[%s273 + $0x48] sm:$0xff]
      %v290 = vld [vmem:[%s273 + $0x50] sm:$0xff]
      %v291 = vld [vmem:[%s273 + $0x58] sm:$0xff]
      %v292 = vld [vmem:[%s273 + $0x60] sm:$0xff]
      %v293 = vld [vmem:[%s273 + $0x68] sm:$0xff]
      %v294 = vld [vmem:[%s273 + $0x70] sm:$0xff]
      %v295 = vld [vmem:[%s273 + $0x78] sm:$0xff]
      %v296 = vld [vmem:[%s273 + $0x80] sm:$0xff]
      %v297 = vld [vmem:[%s273 + $0x88] sm:$0xff]
      %v298 = vld [vmem:[%s273 + $0x90] sm:$0xff]
      %v299 = vld [vmem:[%s273 + $0x98] sm:$0xff]
      %v300 = vld [vmem:[%s273 + $0xa0] sm:$0xff]
      %v301 = vld [vmem:[%s273 + $0xa8] sm:$0xff]
      %v302 = vld [vmem:[%s273 + $0xb0] sm:$0xff]
      %v303 = vld [vmem:[%s273 + $0xb8] sm:$0xff]
      %v304 = vld [vmem:[%s273 + $0xc0] sm:$0xff]
      %v305 = vld [vmem:[%s273 + $0xc8] sm:$0xff]
      %v306 = vld [vmem:[%s273 + $0xd0] sm:$0xff]
      %v307 = vld [vmem:[%s273 + $0xd8] sm:$0xff]
      %v308 = vld [vmem:[%s273 + $0xe0] sm:$0xff]
      %v309 = vld [vmem:[%s273 + $0xe8] sm:$0xff]
      %v310 = vld [vmem:[%s273 + $0xf0] sm:$0xff]
      %v311 = vld [vmem:[%s273 + $0xf8] sm:$0xff]
      %v312 = vpack.c.bf16 %v281, %v280
      %v313 = vpack.c.bf16 %v283, %v282
      %v314 = vpack.c.bf16 %v285, %v284
      %v315 = vpack.c.bf16 %v287, %v286
      %v316 = vpack.c.bf16 %v289, %v288
      %v317 = vpack.c.bf16 %v291, %v290
      %v318 = vpack.c.bf16 %v293, %v292
      %v319 = vpack.c.bf16 %v295, %v294
      %v320 = vpack.c.bf16 %v297, %v296
      %v321 = vpack.c.bf16 %v299, %v298
      %v322 = vpack.c.bf16 %v301, %v300
      %v323 = vpack.c.bf16 %v303, %v302
      %v324 = vpack.c.bf16 %v305, %v304
      %v325 = vpack.c.bf16 %v307, %v306
      %v326 = vpack.c.bf16 %v309, %v308
      %v327 = vpack.c.bf16 %v311, %v310
      %v328 = vld [vmem:[%s1] sm:$0x3]
      %vm329 = vcmask 31744
      %v331 = vsel %vm329, %v312, 0
      %v334 = vsel %vm329, %v313, 0
      %v337 = vsel %vm329, %v314, 0
      %v340 = vsel %vm329, %v315, 0
      %v343 = vsel %vm329, %v316, 0
      %v346 = vsel %vm329, %v317, 0
      %v349 = vsel %vm329, %v318, 0
      %v352 = vsel %vm329, %v319, 0
      %v355 = vsel %vm329, %v320, 0
      %v358 = vsel %vm329, %v321, 0
      %v361 = vsel %vm329, %v322, 0
      %v364 = vsel %vm329, %v323, 0
      %v367 = vsel %vm329, %v324, 0
      %v370 = vsel %vm329, %v325, 0
      %v373 = vsel %vm329, %v326, 0
      %v376 = vsel %vm329, %v327, 0
      %vm378 = vcmask 1041408
      %v380 = vsel %vm378, %v328, 0
      %382 = vmatprep.subr.bf16.mxu0 0
      %383 = vmatpush1.bf16.msra.mxu0 %v380
      %384 = vmatprep.subr.bf16.mxu0 0
      %385 = vmatpush1.bf16.msra.mxu0 0
      %386 = vmatprep.subr.bf16.mxu0 0
      %387 = vmatpush1.bf16.msra.mxu0 0
      %388 = vmatprep.subr.bf16.mxu0 0
      %389 = vmatpush1.bf16.msra.mxu0 0
      %390 = vmatprep.subr.bf16.mxu0 0
      %391 = vmatpush1.bf16.msra.mxu0 0
      %392 = vmatprep.subr.bf16.mxu0 0
      %393 = vmatpush1.bf16.msra.mxu0 0
      %394 = vmatprep.subr.bf16.mxu0 0
      %395 = vmatpush1.bf16.msra.mxu0 0
      %396 = vmatprep.subr.bf16.mxu0 0
      %397 = vmatpush1.bf16.msra.mxu0 0
      %398 = vmatprep.subr.bf16.mxu0 0
      %399 = vmatpush1.bf16.msra.mxu0 0
      %400 = vmatprep.subr.bf16.mxu0 0
      %401 = vmatpush1.bf16.msra.mxu0 0
      %402 = vmatprep.subr.bf16.mxu0 0
      %403 = vmatpush1.bf16.msra.mxu0 0
      %404 = vmatprep.subr.bf16.mxu0 0
      %405 = vmatpush1.bf16.msra.mxu0 0
      %406 = vmatprep.subr.bf16.mxu0 0
      %407 = vmatpush1.bf16.msra.mxu0 0
      %408 = vmatprep.subr.bf16.mxu0 0
      %409 = vmatpush1.bf16.msra.mxu0 0
      %410 = vmatprep.subr.bf16.mxu0 0
      %411 = vmatpush1.bf16.msra.mxu0 0
      %412 = vmatprep.subr.bf16.mxu0 0
      %413 = vmatpush1.bf16.msra.mxu0 0
      %414 = vmatprep.mubr.bf16.mxu0 0
      %415 = vmatmul.mubr.bf16.gmra.mrb[0].mxu0 %v331
      %v416 = vpop.f32.mrb[0].mxu0
      %v417 = vadd.f32 0.0, %v416
      %v418 = vpop.f32.mrb[0].mxu0
      %v419 = vpop.f32.mrb[0].mxu0
      %v420 = vadd.f32 0.0, %v419
      %v421 = vpop.f32.mrb[0].mxu0
      %422 = vmatprep.mubr.bf16.mxu0 0
      %423 = vmatmul.mubr.bf16.gmra.mrb[0].mxu0 %v334
      %v424 = vpop.f32.mrb[0].mxu0
      %v425 = vadd.f32 0.0, %v424
      %v426 = vpop.f32.mrb[0].mxu0
      %v427 = vpop.f32.mrb[0].mxu0
      %v428 = vadd.f32 0.0, %v427
      %v429 = vpop.f32.mrb[0].mxu0
      %430 = vmatprep.mubr.bf16.mxu0 0
      %431 = vmatmul.mubr.bf16.gmra.mrb[0].mxu0 %v337
      %v432 = vpop.f32.mrb[0].mxu0
      %v433 = vadd.f32 0.0, %v432
      %v434 = vpop.f32.mrb[0].mxu0
      %v435 = vpop.f32.mrb[0].mxu0
      %v436 = vadd.f32 0.0, %v435
      %v437 = vpop.f32.mrb[0].mxu0
      %438 = vmatprep.mubr.bf16.mxu0 0
      %439 = vmatmul.mubr.bf16.gmra.mrb[0].mxu0 %v340
      %v440 = vpop.f32.mrb[0].mxu0
      %v441 = vadd.f32 0.0, %v440
      %v442 = vpop.f32.mrb[0].mxu0
      %v443 = vpop.f32.mrb[0].mxu0
      %v444 = vadd.f32 0.0, %v443
      %v445 = vpop.f32.mrb[0].mxu0
      %446 = vmatprep.mubr.bf16.mxu0 0
      %447 = vmatmul.mubr.bf16.gmra.mrb[0].mxu0 %v343
      %v448 = vpop.f32.mrb[0].mxu0
      %v449 = vadd.f32 0.0, %v448
      %v450 = vpop.f32.mrb[0].mxu0
      %v451 = vpop.f32.mrb[0].mxu0
      %v452 = vadd.f32 0.0, %v451
      %v453 = vpop.f32.mrb[0].mxu0
      %454 = vmatprep.mubr.bf16.mxu0 0
      %455 = vmatmul.mubr.bf16.gmra.mrb[0].mxu0 %v346
      %v456 = vpop.f32.mrb[0].mxu0
      %v457 = vadd.f32 0.0, %v456
      %v458 = vpop.f32.mrb[0].mxu0
      %v459 = vpop.f32.mrb[0].mxu0
      %v460 = vadd.f32 0.0, %v459
      %v461 = vpop.f32.mrb[0].mxu0
      %462 = vmatprep.mubr.bf16.mxu0 0
      %463 = vmatmul.mubr.bf16.gmra.mrb[0].mxu0 %v349
      %v464 = vpop.f32.mrb[0].mxu0
      %v465 = vadd.f32 0.0, %v464
      %v466 = vpop.f32.mrb[0].mxu0
      %v467 = vpop.f32.mrb[0].mxu0
      %v468 = vadd.f32 0.0, %v467
      %v469 = vpop.f32.mrb[0].mxu0
      %470 = vmatprep.mubr.bf16.mxu0 0
      %471 = vmatmul.mubr.bf16.gmra.mrb[0].mxu0 %v352
      %v472 = vpop.f32.mrb[0].mxu0
      %v473 = vadd.f32 0.0, %v472
      %v474 = vpop.f32.mrb[0].mxu0
      %v475 = vpop.f32.mrb[0].mxu0
      %v476 = vadd.f32 0.0, %v475
      %v477 = vpop.f32.mrb[0].mxu0
      %478 = vmatprep.mubr.bf16.mxu0 0
      %479 = vmatmul.mubr.bf16.gmra.mrb[0].mxu0 %v355
      %v480 = vpop.f32.mrb[0].mxu0
      %v481 = vadd.f32 0.0, %v480
      %v482 = vpop.f32.mrb[0].mxu0
      %v483 = vpop.f32.mrb[0].mxu0
      %v484 = vadd.f32 0.0, %v483
      %v485 = vpop.f32.mrb[0].mxu0
      %486 = vmatprep.mubr.bf16.mxu0 0
      %487 = vmatmul.mubr.bf16.gmra.mrb[0].mxu0 %v358
      %v488 = vpop.f32.mrb[0].mxu0
      %v489 = vadd.f32 0.0, %v488
      %v490 = vpop.f32.mrb[0].mxu0
      %v491 = vpop.f32.mrb[0].mxu0
      %v492 = vadd.f32 0.0, %v491
      %v493 = vpop.f32.mrb[0].mxu0
      %494 = vmatprep.mubr.bf16.mxu0 0
      %495 = vmatmul.mubr.bf16.gmra.mrb[0].mxu0 %v361
      %v496 = vpop.f32.mrb[0].mxu0
      %v497 = vadd.f32 0.0, %v496
      %v498 = vpop.f32.mrb[0].mxu0
      %v499 = vpop.f32.mrb[0].mxu0
      %v500 = vadd.f32 0.0, %v499
      %v501 = vpop.f32.mrb[0].mxu0
      %502 = vmatprep.mubr.bf16.mxu0 0
      %503 = vmatmul.mubr.bf16.gmra.mrb[0].mxu0 %v364
      %v504 = vpop.f32.mrb[0].mxu0
      %v505 = vadd.f32 0.0, %v504
      %v506 = vpop.f32.mrb[0].mxu0
      %v507 = vpop.f32.mrb[0].mxu0
      %v508 = vadd.f32 0.0, %v507
      %v509 = vpop.f32.mrb[0].mxu0
      %510 = vmatprep.mubr.bf16.mxu0 0
      %511 = vmatmul.mubr.bf16.gmra.mrb[0].mxu0 %v367
      %v512 = vpop.f32.mrb[0].mxu0
      %v513 = vadd.f32 0.0, %v512
      %v514 = vpop.f32.mrb[0].mxu0
      %v515 = vpop.f32.mrb[0].mxu0
      %v516 = vadd.f32 0.0, %v515
      %v517 = vpop.f32.mrb[0].mxu0
      %518 = vmatprep.mubr.bf16.mxu0 0
      %519 = vmatmul.mubr.bf16.gmra.mrb[0].mxu0 %v370
      %v520 = vpop.f32.mrb[0].mxu0
      %v521 = vadd.f32 0.0, %v520
      %v522 = vpop.f32.mrb[0].mxu0
      %v523 = vpop.f32.mrb[0].mxu0
      %v524 = vadd.f32 0.0, %v523
      %v525 = vpop.f32.mrb[0].mxu0
      %526 = vmatprep.mubr.bf16.mxu0 0
      %527 = vmatmul.mubr.bf16.gmra.mrb[0].mxu0 %v373
      %v528 = vpop.f32.mrb[0].mxu0
      %v529 = vadd.f32 0.0, %v528
      %v530 = vpop.f32.mrb[0].mxu0
      %v531 = vpop.f32.mrb[0].mxu0
      %v532 = vadd.f32 0.0, %v531
      %v533 = vpop.f32.mrb[0].mxu0
      %534 = vmatprep.mubr.bf16.mxu0 0
      %535 = vmatmul.mubr.bf16.gmra.mrb[0].mxu0 %v376
      %v536 = vpop.f32.mrb[0].mxu0
      %v537 = vadd.f32 0.0, %v536
      %v538 = vpop.f32.mrb[0].mxu0
      %v539 = vpop.f32.mrb[0].mxu0
      %v540 = vadd.f32 0.0, %v539
      %v541 = vpop.f32.mrb[0].mxu0
      %542 = vdwg.mxu0
      %v543 = vld [vmem:[%s2] sm:$0x1]
      %v545 = vlaneseq
      %v546 = vshrl.u32 %v545, 7
      %v547 = vsub.s32 0, %v546
      %v548 = vrot.slane %v543, %v547
      %v550 = vmul.f32 %v417, %v548
      %v551 = vmul.f32 %v420, %v548
      %v552 = vmul.f32 %v425, %v548
      %v553 = vmul.f32 %v428, %v548
      %v554 = vmul.f32 %v433, %v548
      %v555 = vmul.f32 %v436, %v548
      %v556 = vmul.f32 %v441, %v548
      %v557 = vmul.f32 %v444, %v548
      %v558 = vmul.f32 %v449, %v548
      %v559 = vmul.f32 %v452, %v548
      %v560 = vmul.f32 %v457, %v548
      %v561 = vmul.f32 %v460, %v548
      %v562 = vmul.f32 %v465, %v548
      %v563 = vmul.f32 %v468, %v548
      %v564 = vmul.f32 %v473, %v548
      %v565 = vmul.f32 %v476, %v548
      %v566 = vmul.f32 %v481, %v548
      %v567 = vmul.f32 %v484, %v548
      %v568 = vmul.f32 %v489, %v548
      %v569 = vmul.f32 %v492, %v548
      %v570 = vmul.f32 %v497, %v548
      %v571 = vmul.f32 %v500, %v548
      %v572 = vmul.f32 %v505, %v548
      %v573 = vmul.f32 %v508, %v548
      %v574 = vmul.f32 %v513, %v548
      %v575 = vmul.f32 %v516, %v548
      %v576 = vmul.f32 %v521, %v548
      %v577 = vmul.f32 %v524, %v548
      %v578 = vmul.f32 %v529, %v548
      %v579 = vmul.f32 %v532, %v548
      %v580 = vmul.f32 %v537, %v548
      %v581 = vmul.f32 %v540, %v548
      %v582 = vld [vmem:[%s3] sm:$0x1]
      %v584 = vlaneseq
      %v585 = vshrl.u32 %v584, 7
      %v586 = vsub.s32 0, %v585
      %v587 = vrot.slane %v582, %v586
      %v589 = vadd.f32 %v550, %v587
      %v590 = vadd.f32 %v551, %v587
      %v591 = vadd.f32 %v552, %v587
      %v592 = vadd.f32 %v553, %v587
      %v593 = vadd.f32 %v554, %v587
      %v594 = vadd.f32 %v555, %v587
      %v595 = vadd.f32 %v556, %v587
      %v596 = vadd.f32 %v557, %v587
      %v597 = vadd.f32 %v558, %v587
      %v598 = vadd.f32 %v559, %v587
      %v599 = vadd.f32 %v560, %v587
      %v600 = vadd.f32 %v561, %v587
      %v601 = vadd.f32 %v562, %v587
      %v602 = vadd.f32 %v563, %v587
      %v603 = vadd.f32 %v564, %v587
      %v604 = vadd.f32 %v565, %v587
      %v605 = vadd.f32 %v566, %v587
      %v606 = vadd.f32 %v567, %v587
      %v607 = vadd.f32 %v568, %v587
      %v608 = vadd.f32 %v569, %v587
      %v609 = vadd.f32 %v570, %v587
      %v610 = vadd.f32 %v571, %v587
      %v611 = vadd.f32 %v572, %v587
      %v612 = vadd.f32 %v573, %v587
      %v613 = vadd.f32 %v574, %v587
      %v614 = vadd.f32 %v575, %v587
      %v615 = vadd.f32 %v576, %v587
      %v616 = vadd.f32 %v577, %v587
      %v617 = vadd.f32 %v578, %v587
      %v618 = vadd.f32 %v579, %v587
      %v619 = vadd.f32 %v580, %v587
      %v620 = vadd.f32 %v581, %v587
      %v621 = vsub.f32 0.0, %v589
      %v622 = vsub.f32 0.0, %v590
      %v623 = vsub.f32 0.0, %v591
      %v624 = vsub.f32 0.0, %v592
      %v625 = vsub.f32 0.0, %v593
      %v626 = vsub.f32 0.0, %v594
      %v627 = vsub.f32 0.0, %v595
      %v628 = vsub.f32 0.0, %v596
      %v629 = vsub.f32 0.0, %v597
      %v630 = vsub.f32 0.0, %v598
      %v631 = vsub.f32 0.0, %v599
      %v632 = vsub.f32 0.0, %v600
      %v633 = vsub.f32 0.0, %v601
      %v634 = vsub.f32 0.0, %v602
      %v635 = vsub.f32 0.0, %v603
      %v636 = vsub.f32 0.0, %v604
      %v637 = vsub.f32 0.0, %v605
      %v638 = vsub.f32 0.0, %v606
      %v639 = vsub.f32 0.0, %v607
      %v640 = vsub.f32 0.0, %v608
      %v641 = vsub.f32 0.0, %v609
      %v642 = vsub.f32 0.0, %v610
      %v643 = vsub.f32 0.0, %v611
      %v644 = vsub.f32 0.0, %v612
      %v645 = vsub.f32 0.0, %v613
      %v646 = vsub.f32 0.0, %v614
      %v647 = vsub.f32 0.0, %v615
      %v648 = vsub.f32 0.0, %v616
      %v649 = vsub.f32 0.0, %v617
      %v650 = vsub.f32 0.0, %v618
      %v651 = vsub.f32 0.0, %v619
      %v652 = vsub.f32 0.0, %v620
      %v653 = vmul.f32 %v621, 1.442695
      %v654 = vpow.pop %v653
      %v655 = vmul.f32 %v622, 1.442695
      %v656 = vpow.pop %v655
      %v657 = vmul.f32 %v623, 1.442695
      %v658 = vpow.pop %v657
      %v659 = vmul.f32 %v624, 1.442695
      %v660 = vpow.pop %v659
      %v661 = vmul.f32 %v625, 1.442695
      %v662 = vpow.pop %v661
      %v663 = vmul.f32 %v626, 1.442695
      %v664 = vpow.pop %v663
      %v665 = vmul.f32 %v627, 1.442695
      %v666 = vpow.pop %v665
      %v667 = vmul.f32 %v628, 1.442695
      %v668 = vpow.pop %v667
      %v669 = vmul.f32 %v629, 1.442695
      %v670 = vpow.pop %v669
      %v671 = vmul.f32 %v630, 1.442695
      %v672 = vpow.pop %v671
      %v673 = vmul.f32 %v631, 1.442695
      %v674 = vpow.pop %v673
      %v675 = vmul.f32 %v632, 1.442695
      %v676 = vpow.pop %v675
      %v677 = vmul.f32 %v633, 1.442695
      %v678 = vpow.pop %v677
      %v679 = vmul.f32 %v634, 1.442695
      %v680 = vpow.pop %v679
      %v681 = vmul.f32 %v635, 1.442695
      %v682 = vpow.pop %v681
      %v683 = vmul.f32 %v636, 1.442695
      %v684 = vpow.pop %v683
      %v685 = vmul.f32 %v637, 1.442695
      %v686 = vpow.pop %v685
      %v687 = vmul.f32 %v638, 1.442695
      %v688 = vpow.pop %v687
      %v689 = vmul.f32 %v639, 1.442695
      %v690 = vpow.pop %v689
      %v691 = vmul.f32 %v640, 1.442695
      %v692 = vpow.pop %v691
      %v693 = vmul.f32 %v641, 1.442695
      %v694 = vpow.pop %v693
      %v695 = vmul.f32 %v642, 1.442695
      %v696 = vpow.pop %v695
      %v697 = vmul.f32 %v643, 1.442695
      %v698 = vpow.pop %v697
      %v699 = vmul.f32 %v644, 1.442695
      %v700 = vpow.pop %v699
      %v701 = vmul.f32 %v645, 1.442695
      %v702 = vpow.pop %v701
      %v703 = vmul.f32 %v646, 1.442695
      %v704 = vpow.pop %v703
      %v705 = vmul.f32 %v647, 1.442695
      %v706 = vpow.pop %v705
      %v707 = vmul.f32 %v648, 1.442695
      %v708 = vpow.pop %v707
      %v709 = vmul.f32 %v649, 1.442695
      %v710 = vpow.pop %v709
      %v711 = vmul.f32 %v650, 1.442695
      %v712 = vpow.pop %v711
      %v713 = vmul.f32 %v651, 1.442695
      %v714 = vpow.pop %v713
      %v715 = vmul.f32 %v652, 1.442695
      %v716 = vpow.pop %v715
      %v717 = vadd.f32 %v654, 1.0
      %v718 = vadd.f32 %v656, 1.0
      %v719 = vadd.f32 %v658, 1.0
      %v720 = vadd.f32 %v660, 1.0
      %v721 = vadd.f32 %v662, 1.0
      %v722 = vadd.f32 %v664, 1.0
      %v723 = vadd.f32 %v666, 1.0
      %v724 = vadd.f32 %v668, 1.0
      %v725 = vadd.f32 %v670, 1.0
      %v726 = vadd.f32 %v672, 1.0
      %v727 = vadd.f32 %v674, 1.0
      %v728 = vadd.f32 %v676, 1.0
      %v729 = vadd.f32 %v678, 1.0
      %v730 = vadd.f32 %v680, 1.0
      %v731 = vadd.f32 %v682, 1.0
      %v732 = vadd.f32 %v684, 1.0
      %v733 = vadd.f32 %v686, 1.0
      %v734 = vadd.f32 %v688, 1.0
      %v735 = vadd.f32 %v690, 1.0
      %v736 = vadd.f32 %v692, 1.0
      %v737 = vadd.f32 %v694, 1.0
      %v738 = vadd.f32 %v696, 1.0
      %v739 = vadd.f32 %v698, 1.0
      %v740 = vadd.f32 %v700, 1.0
      %v741 = vadd.f32 %v702, 1.0
      %v742 = vadd.f32 %v704, 1.0
      %v743 = vadd.f32 %v706, 1.0
      %v744 = vadd.f32 %v708, 1.0
      %v745 = vadd.f32 %v710, 1.0
      %v746 = vadd.f32 %v712, 1.0
      %v747 = vadd.f32 %v714, 1.0
      %v748 = vadd.f32 %v716, 1.0
      %v749 = vrcp.pop %v717
      %v750 = vrcp.pop %v718
      %v751 = vrcp.pop %v719
      %v752 = vrcp.pop %v720
      %v753 = vrcp.pop %v721
      %v754 = vrcp.pop %v722
      %v755 = vrcp.pop %v723
      %v756 = vrcp.pop %v724
      %v757 = vrcp.pop %v725
      %v758 = vrcp.pop %v726
      %v759 = vrcp.pop %v727
      %v760 = vrcp.pop %v728
      %v761 = vrcp.pop %v729
      %v762 = vrcp.pop %v730
      %v763 = vrcp.pop %v731
      %v764 = vrcp.pop %v732
      %v765 = vrcp.pop %v733
      %v766 = vrcp.pop %v734
      %v767 = vrcp.pop %v735
      %v768 = vrcp.pop %v736
      %v769 = vrcp.pop %v737
      %v770 = vrcp.pop %v738
      %v771 = vrcp.pop %v739
      %v772 = vrcp.pop %v740
      %v773 = vrcp.pop %v741
      %v774 = vrcp.pop %v742
      %v775 = vrcp.pop %v743
      %v776 = vrcp.pop %v744
      %v777 = vrcp.pop %v745
      %v778 = vrcp.pop %v746
      %v779 = vrcp.pop %v747
      %v780 = vrcp.pop %v748
      %v781 = vmul.f32 %v589, %v749
      %v782 = vmul.f32 %v590, %v750
      %v783 = vmul.f32 %v591, %v751
      %v784 = vmul.f32 %v592, %v752
      %v785 = vmul.f32 %v593, %v753
      %v786 = vmul.f32 %v594, %v754
      %v787 = vmul.f32 %v595, %v755
      %v788 = vmul.f32 %v596, %v756
      %v789 = vmul.f32 %v597, %v757
      %v790 = vmul.f32 %v598, %v758
      %v791 = vmul.f32 %v599, %v759
      %v792 = vmul.f32 %v600, %v760
      %v793 = vmul.f32 %v601, %v761
      %v794 = vmul.f32 %v602, %v762
      %v795 = vmul.f32 %v603, %v763
      %v796 = vmul.f32 %v604, %v764
      %v797 = vmul.f32 %v605, %v765
      %v798 = vmul.f32 %v606, %v766
      %v799 = vmul.f32 %v607, %v767
      %v800 = vmul.f32 %v608, %v768
      %v801 = vmul.f32 %v609, %v769
      %v802 = vmul.f32 %v610, %v770
      %v803 = vmul.f32 %v611, %v771
      %v804 = vmul.f32 %v612, %v772
      %v805 = vmul.f32 %v613, %v773
      %v806 = vmul.f32 %v614, %v774
      %v807 = vmul.f32 %v615, %v775
      %v808 = vmul.f32 %v616, %v776
      %v809 = vmul.f32 %v617, %v777
      %v810 = vmul.f32 %v618, %v778
      %v811 = vmul.f32 %v619, %v779
      %v812 = vmul.f32 %v620, %v780
      %v813 = vlaneseq
      %v814 = vshrl.u32 %v813, 7
      %v815 = vadd.s32 %v814, 8
      %vm816 = vcmp.eq.s32.totalorder %v814, 15
      %vm817 = vcmp.eq.s32.totalorder %v815, 15
      %v818 = vsel %vm816, 0.0, %v781
      %v819 = vsel %vm817, 0.0, %v782
      %v820 = vsel %vm816, 0.0, %v783
      %v821 = vsel %vm817, 0.0, %v784
      %v822 = vsel %vm816, 0.0, %v785
      %v823 = vsel %vm817, 0.0, %v786
      %v824 = vsel %vm816, 0.0, %v787
      %v825 = vsel %vm817, 0.0, %v788
      %v826 = vsel %vm816, 0.0, %v789
      %v827 = vsel %vm817, 0.0, %v790
      %v828 = vsel %vm816, 0.0, %v791
      %v829 = vsel %vm817, 0.0, %v792
      %v830 = vsel %vm816, 0.0, %v793
      %v831 = vsel %vm817, 0.0, %v794
      %v832 = vsel %vm816, 0.0, %v795
      %v833 = vsel %vm817, 0.0, %v796
      %v834 = vsel %vm816, 0.0, %v797
      %v835 = vsel %vm817, 0.0, %v798
      %v836 = vsel %vm816, 0.0, %v799
      %v837 = vsel %vm817, 0.0, %v800
      %v838 = vsel %vm816, 0.0, %v801
      %v839 = vsel %vm817, 0.0, %v802
      %v840 = vsel %vm816, 0.0, %v803
      %v841 = vsel %vm817, 0.0, %v804
      %v842 = vsel %vm816, 0.0, %v805
      %v843 = vsel %vm817, 0.0, %v806
      %v844 = vsel %vm816, 0.0, %v807
      %v845 = vsel %vm817, 0.0, %v808
      %v846 = vsel %vm816, 0.0, %v809
      %v847 = vsel %vm817, 0.0, %v810
      %v848 = vsel %vm816, 0.0, %v811
      %v849 = vsel %vm817, 0.0, %v812
      %vm850 = vcmp.eq.s32.totalorder %v814, 0
      %vm851 = vcmp.eq.s32.totalorder %v815, 0
      %v852 = vsel %vm850, 0.0, %v781
      %v853 = vsel %vm851, 0.0, %v782
      %v854 = vsel %vm850, 0.0, %v783
      %v855 = vsel %vm851, 0.0, %v784
      %v856 = vsel %vm850, 0.0, %v785
      %v857 = vsel %vm851, 0.0, %v786
      %v858 = vsel %vm850, 0.0, %v787
      %v859 = vsel %vm851, 0.0, %v788
      %v860 = vsel %vm850, 0.0, %v789
      %v861 = vsel %vm851, 0.0, %v790
      %v862 = vsel %vm850, 0.0, %v791
      %v863 = vsel %vm851, 0.0, %v792
      %v864 = vsel %vm850, 0.0, %v793
      %v865 = vsel %vm851, 0.0, %v794
      %v866 = vsel %vm850, 0.0, %v795
      %v867 = vsel %vm851, 0.0, %v796
      %v868 = vsel %vm850, 0.0, %v797
      %v869 = vsel %vm851, 0.0, %v798
      %v870 = vsel %vm850, 0.0, %v799
      %v871 = vsel %vm851, 0.0, %v800
      %v872 = vsel %vm850, 0.0, %v801
      %v873 = vsel %vm851, 0.0, %v802
      %v874 = vsel %vm850, 0.0, %v803
      %v875 = vsel %vm851, 0.0, %v804
      %v876 = vsel %vm850, 0.0, %v805
      %v877 = vsel %vm851, 0.0, %v806
      %v878 = vsel %vm850, 0.0, %v807
      %v879 = vsel %vm851, 0.0, %v808
      %v880 = vsel %vm850, 0.0, %v809
      %v881 = vsel %vm851, 0.0, %v810
      %v882 = vsel %vm850, 0.0, %v811
      %v883 = vsel %vm851, 0.0, %v812
      %vm884 = vcmask 48128
      %885 = vst.msk [vmem:[#allocation2] sm:$0xff] %vm884, 0.0
      %886 = vst.msk [vmem:[#allocation2 + $0x8] sm:$0xff] %vm884, 0.0
      %vm887 = vcmask 40960
      %888 = vst.msk [vmem:[#allocation2 + $0x10] sm:$0x1] %vm887, 0.0
      %889 = vst.msk [vmem:[#allocation2 + $0x10f] sm:$0xff] %vm884, 0.0
      %890 = vst.msk [vmem:[#allocation2 + $0x117] sm:$0xff] %vm884, 0.0
      %891 = vst.msk [vmem:[#allocation2 + $0x11f] sm:$0x1] %vm887, 0.0
      %vm892 = vcmask 15360
      %893 = vst.msk [vmem:[#allocation2 + $0x11] sm:$0xff] %vm892, %v818
      %894 = vst.msk [vmem:[#allocation2 + $0x19] sm:$0xff] %vm892, %v819
      %895 = vst.msk [vmem:[#allocation2 + $0x21] sm:$0xff] %vm892, %v820
      %896 = vst.msk [vmem:[#allocation2 + $0x29] sm:$0xff] %vm892, %v821
      %897 = vst.msk [vmem:[#allocation2 + $0x31] sm:$0xff] %vm892, %v822
      %898 = vst.msk [vmem:[#allocation2 + $0x39] sm:$0xff] %vm892, %v823
      %899 = vst.msk [vmem:[#allocation2 + $0x41] sm:$0xff] %vm892, %v824
      %900 = vst.msk [vmem:[#allocation2 + $0x49] sm:$0xff] %vm892, %v825
      %901 = vst.msk [vmem:[#allocation2 + $0x51] sm:$0xff] %vm892, %v826
      %902 = vst.msk [vmem:[#allocation2 + $0x59] sm:$0xff] %vm892, %v827
      %903 = vst.msk [vmem:[#allocation2 + $0x61] sm:$0xff] %vm892, %v828
      %904 = vst.msk [vmem:[#allocation2 + $0x69] sm:$0xff] %vm892, %v829
      %905 = vst.msk [vmem:[#allocation2 + $0x71] sm:$0xff] %vm892, %v830
      %906 = vst.msk [vmem:[#allocation2 + $0x79] sm:$0xff] %vm892, %v831
      %907 = vst.msk [vmem:[#allocation2 + $0x81] sm:$0xff] %vm892, %v832
      %908 = vst.msk [vmem:[#allocation2 + $0x89] sm:$0xff] %vm892, %v833
      %909 = vst.msk [vmem:[#allocation2 + $0x91] sm:$0xff] %vm892, %v834
      %910 = vst.msk [vmem:[#allocation2 + $0x99] sm:$0xff] %vm892, %v835
      %911 = vst.msk [vmem:[#allocation2 + $0xa1] sm:$0xff] %vm892, %v836
      %912 = vst.msk [vmem:[#allocation2 + $0xa9] sm:$0xff] %vm892, %v837
      %913 = vst.msk [vmem:[#allocation2 + $0xb1] sm:$0xff] %vm892, %v838
      %914 = vst.msk [vmem:[#allocation2 + $0xb9] sm:$0xff] %vm892, %v839
      %915 = vst.msk [vmem:[#allocation2 + $0xc1] sm:$0xff] %vm892, %v840
      %916 = vst.msk [vmem:[#allocation2 + $0xc9] sm:$0xff] %vm892, %v841
      %917 = vst.msk [vmem:[#allocation2 + $0xd1] sm:$0xff] %vm892, %v842
      %918 = vst.msk [vmem:[#allocation2 + $0xd9] sm:$0xff] %vm892, %v843
      %919 = vst.msk [vmem:[#allocation2 + $0xe1] sm:$0xff] %vm892, %v844
      %920 = vst.msk [vmem:[#allocation2 + $0xe9] sm:$0xff] %vm892, %v845
      %921 = vst.msk [vmem:[#allocation2 + $0xf1] sm:$0xff] %vm892, %v846
      %922 = vst.msk [vmem:[#allocation2 + $0xf9] sm:$0xff] %vm892, %v847
      %923 = vst.msk [vmem:[#allocation2 + $0x101] sm:$0xff] %vm892, %v848
      %924 = vst.msk [vmem:[#allocation2 + $0x109] sm:$0xff] %vm892, %v849
      %957 = vrot.lane.b32.xlu0 %v781, 2
      %v958 = vpop.permute.xlu0 %957
      %959 = vrot.lane.b32.xlu0 %v782, 2
      %v960 = vpop.permute.xlu0 %959
      %961 = vrot.lane.b32.xlu0 %v783, 2
      %v962 = vpop.permute.xlu0 %961
      %963 = vrot.lane.b32.xlu0 %v784, 2
      %v964 = vpop.permute.xlu0 %963
      %965 = vrot.lane.b32.xlu0 %v785, 2
      %v966 = vpop.permute.xlu0 %965
      %967 = vrot.lane.b32.xlu0 %v786, 2
      %v968 = vpop.permute.xlu0 %967
      %969 = vrot.lane.b32.xlu0 %v787, 2
      %v970 = vpop.permute.xlu0 %969
      %971 = vrot.lane.b32.xlu0 %v788, 2
      %v972 = vpop.permute.xlu0 %971
      %973 = vrot.lane.b32.xlu0 %v789, 2
      %v974 = vpop.permute.xlu0 %973
      %975 = vrot.lane.b32.xlu0 %v790, 2
      %v976 = vpop.permute.xlu0 %975
      %977 = vrot.lane.b32.xlu0 %v791, 2
      %v978 = vpop.permute.xlu0 %977
      %979 = vrot.lane.b32.xlu0 %v792, 2
      %v980 = vpop.permute.xlu0 %979
      %981 = vrot.lane.b32.xlu0 %v793, 2
      %v982 = vpop.permute.xlu0 %981
      %983 = vrot.lane.b32.xlu0 %v794, 2
      %v984 = vpop.permute.xlu0 %983
      %985 = vrot.lane.b32.xlu0 %v795, 2
      %v986 = vpop.permute.xlu0 %985
      %987 = vrot.lane.b32.xlu0 %v796, 2
      %v988 = vpop.permute.xlu0 %987
      %989 = vrot.lane.b32.xlu0 %v797, 2
      %v990 = vpop.permute.xlu0 %989
      %991 = vrot.lane.b32.xlu0 %v798, 2
      %v992 = vpop.permute.xlu0 %991
      %993 = vrot.lane.b32.xlu0 %v799, 2
      %v994 = vpop.permute.xlu0 %993
      %995 = vrot.lane.b32.xlu0 %v800, 2
      %v996 = vpop.permute.xlu0 %995
      %997 = vrot.lane.b32.xlu0 %v801, 2
      %v998 = vpop.permute.xlu0 %997
      %999 = vrot.lane.b32.xlu0 %v802, 2
      %v1000 = vpop.permute.xlu0 %999
      %1001 = vrot.lane.b32.xlu0 %v803, 2
      %v1002 = vpop.permute.xlu0 %1001
      %1003 = vrot.lane.b32.xlu0 %v804, 2
      %v1004 = vpop.permute.xlu0 %1003
      %1005 = vrot.lane.b32.xlu0 %v805, 2
      %v1006 = vpop.permute.xlu0 %1005
      %1007 = vrot.lane.b32.xlu0 %v806, 2
      %v1008 = vpop.permute.xlu0 %1007
      %1009 = vrot.lane.b32.xlu0 %v807, 2
      %v1010 = vpop.permute.xlu0 %1009
      %1011 = vrot.lane.b32.xlu0 %v808, 2
      %v1012 = vpop.permute.xlu0 %1011
      %1013 = vrot.lane.b32.xlu0 %v809, 2
      %v1014 = vpop.permute.xlu0 %1013
      %1015 = vrot.lane.b32.xlu0 %v810, 2
      %v1016 = vpop.permute.xlu0 %1015
      %1017 = vrot.lane.b32.xlu0 %v811, 2
      %v1018 = vpop.permute.xlu0 %1017
      %1019 = vrot.lane.b32.xlu0 %v812, 2
      %v1020 = vpop.permute.xlu0 %1019
      %vm1053 = vcmask 31760
      %1054 = vst.msk [vmem:[#allocation2 + $0x10] sm:$0xff] %vm1053, %v958
      %1055 = vst.msk [vmem:[#allocation2 + $0x18] sm:$0xff] %vm1053, %v960
      %1056 = vst.msk [vmem:[#allocation2 + $0x20] sm:$0xff] %vm1053, %v962
      %1057 = vst.msk [vmem:[#allocation2 + $0x28] sm:$0xff] %vm1053, %v964
      %1058 = vst.msk [vmem:[#allocation2 + $0x30] sm:$0xff] %vm1053, %v966
      %1059 = vst.msk [vmem:[#allocation2 + $0x38] sm:$0xff] %vm1053, %v968
      %1060 = vst.msk [vmem:[#allocation2 + $0x40] sm:$0xff] %vm1053, %v970
      %1061 = vst.msk [vmem:[#allocation2 + $0x48] sm:$0xff] %vm1053, %v972
      %1062 = vst.msk [vmem:[#allocation2 + $0x50] sm:$0xff] %vm1053, %v974
      %1063 = vst.msk [vmem:[#allocation2 + $0x58] sm:$0xff] %vm1053, %v976
      %1064 = vst.msk [vmem:[#allocation2 + $0x60] sm:$0xff] %vm1053, %v978
      %1065 = vst.msk [vmem:[#allocation2 + $0x68] sm:$0xff] %vm1053, %v980
      %1066 = vst.msk [vmem:[#allocation2 + $0x70] sm:$0xff] %vm1053, %v982
      %1067 = vst.msk [vmem:[#allocation2 + $0x78] sm:$0xff] %vm1053, %v984
      %1068 = vst.msk [vmem:[#allocation2 + $0x80] sm:$0xff] %vm1053, %v986
      %1069 = vst.msk [vmem:[#allocation2 + $0x88] sm:$0xff] %vm1053, %v988
      %1070 = vst.msk [vmem:[#allocation2 + $0x90] sm:$0xff] %vm1053, %v990
      %1071 = vst.msk [vmem:[#allocation2 + $0x98] sm:$0xff] %vm1053, %v992
      %1072 = vst.msk [vmem:[#allocation2 + $0xa0] sm:$0xff] %vm1053, %v994
      %1073 = vst.msk [vmem:[#allocation2 + $0xa8] sm:$0xff] %vm1053, %v996
      %1074 = vst.msk [vmem:[#allocation2 + $0xb0] sm:$0xff] %vm1053, %v998
      %1075 = vst.msk [vmem:[#allocation2 + $0xb8] sm:$0xff] %vm1053, %v1000
      %1076 = vst.msk [vmem:[#allocation2 + $0xc0] sm:$0xff] %vm1053, %v1002
      %1077 = vst.msk [vmem:[#allocation2 + $0xc8] sm:$0xff] %vm1053, %v1004
      %1078 = vst.msk [vmem:[#allocation2 + $0xd0] sm:$0xff] %vm1053, %v1006
      %1079 = vst.msk [vmem:[#allocation2 + $0xd8] sm:$0xff] %vm1053, %v1008
      %1080 = vst.msk [vmem:[#allocation2 + $0xe0] sm:$0xff] %vm1053, %v1010
      %1081 = vst.msk [vmem:[#allocation2 + $0xe8] sm:$0xff] %vm1053, %v1012
      %1082 = vst.msk [vmem:[#allocation2 + $0xf0] sm:$0xff] %vm1053, %v1014
      %1083 = vst.msk [vmem:[#allocation2 + $0xf8] sm:$0xff] %vm1053, %v1016
      %1084 = vst.msk [vmem:[#allocation2 + $0x100] sm:$0xff] %vm1053, %v1018
      %1085 = vst.msk [vmem:[#allocation2 + $0x108] sm:$0xff] %vm1053, %v1020
      %1118 = vrot.lane.b32.xlu0 %v852, 4
      %v1119 = vpop.permute.xlu0 %1118
      %1120 = vrot.lane.b32.xlu0 %v853, 4
      %v1121 = vpop.permute.xlu0 %1120
      %1122 = vrot.lane.b32.xlu0 %v854, 4
      %v1123 = vpop.permute.xlu0 %1122
      %1124 = vrot.lane.b32.xlu0 %v855, 4
      %v1125 = vpop.permute.xlu0 %1124
      %1126 = vrot.lane.b32.xlu0 %v856, 4
      %v1127 = vpop.permute.xlu0 %1126
      %1128 = vrot.lane.b32.xlu0 %v857, 4
      %v1129 = vpop.permute.xlu0 %1128
      %1130 = vrot.lane.b32.xlu0 %v858, 4
      %v1131 = vpop.permute.xlu0 %1130
      %1132 = vrot.lane.b32.xlu0 %v859, 4
      %v1133 = vpop.permute.xlu0 %1132
      %1134 = vrot.lane.b32.xlu0 %v860, 4
      %v1135 = vpop.permute.xlu0 %1134
      %1136 = vrot.lane.b32.xlu0 %v861, 4
      %v1137 = vpop.permute.xlu0 %1136
      %1138 = vrot.lane.b32.xlu0 %v862, 4
      %v1139 = vpop.permute.xlu0 %1138
      %1140 = vrot.lane.b32.xlu0 %v863, 4
      %v1141 = vpop.permute.xlu0 %1140
      %1142 = vrot.lane.b32.xlu0 %v864, 4
      %v1143 = vpop.permute.xlu0 %1142
      %1144 = vrot.lane.b32.xlu0 %v865, 4
      %v1145 = vpop.permute.xlu0 %1144
      %1146 = vrot.lane.b32.xlu0 %v866, 4
      %v1147 = vpop.permute.xlu0 %1146
      %1148 = vrot.lane.b32.xlu0 %v867, 4
      %v1149 = vpop.permute.xlu0 %1148
      %1150 = vrot.lane.b32.xlu0 %v868, 4
      %v1151 = vpop.permute.xlu0 %1150
      %1152 = vrot.lane.b32.xlu0 %v869, 4
      %v1153 = vpop.permute.xlu0 %1152
      %1154 = vrot.lane.b32.xlu0 %v870, 4
      %v1155 = vpop.permute.xlu0 %1154
      %1156 = vrot.lane.b32.xlu0 %v871, 4
      %v1157 = vpop.permute.xlu0 %1156
      %1158 = vrot.lane.b32.xlu0 %v872, 4
      %v1159 = vpop.permute.xlu0 %1158
      %1160 = vrot.lane.b32.xlu0 %v873, 4
      %v1161 = vpop.permute.xlu0 %1160
      %1162 = vrot.lane.b32.xlu0 %v874, 4
      %v1163 = vpop.permute.xlu0 %1162
      %1164 = vrot.lane.b32.xlu0 %v875, 4
      %v1165 = vpop.permute.xlu0 %1164
      %1166 = vrot.lane.b32.xlu0 %v876, 4
      %v1167 = vpop.permute.xlu0 %1166
      %1168 = vrot.lane.b32.xlu0 %v877, 4
      %v1169 = vpop.permute.xlu0 %1168
      %1170 = vrot.lane.b32.xlu0 %v878, 4
      %v1171 = vpop.permute.xlu0 %1170
      %1172 = vrot.lane.b32.xlu0 %v879, 4
      %v1173 = vpop.permute.xlu0 %1172
      %1174 = vrot.lane.b32.xlu0 %v880, 4
      %v1175 = vpop.permute.xlu0 %1174
      %1176 = vrot.lane.b32.xlu0 %v881, 4
      %v1177 = vpop.permute.xlu0 %1176
      %1178 = vrot.lane.b32.xlu0 %v882, 4
      %v1179 = vpop.permute.xlu0 %1178
      %1180 = vrot.lane.b32.xlu0 %v883, 4
      %v1181 = vpop.permute.xlu0 %1180
      %vm1214 = vcmask 48160
      %1215 = vst.msk [vmem:[#allocation2 + $0xf] sm:$0xff] %vm1214, %v1119
      %1216 = vst.msk [vmem:[#allocation2 + $0x17] sm:$0xff] %vm1214, %v1121
      %1217 = vst.msk [vmem:[#allocation2 + $0x1f] sm:$0xff] %vm1214, %v1123
      %1218 = vst.msk [vmem:[#allocation2 + $0x27] sm:$0xff] %vm1214, %v1125
      %1219 = vst.msk [vmem:[#allocation2 + $0x2f] sm:$0xff] %vm1214, %v1127
      %1220 = vst.msk [vmem:[#allocation2 + $0x37] sm:$0xff] %vm1214, %v1129
      %1221 = vst.msk [vmem:[#allocation2 + $0x3f] sm:$0xff] %vm1214, %v1131
      %1222 = vst.msk [vmem:[#allocation2 + $0x47] sm:$0xff] %vm1214, %v1133
      %1223 = vst.msk [vmem:[#allocation2 + $0x4f] sm:$0xff] %vm1214, %v1135
      %1224 = vst.msk [vmem:[#allocation2 + $0x57] sm:$0xff] %vm1214, %v1137
      %1225 = vst.msk [vmem:[#allocation2 + $0x5f] sm:$0xff] %vm1214, %v1139
      %1226 = vst.msk [vmem:[#allocation2 + $0x67] sm:$0xff] %vm1214, %v1141
      %1227 = vst.msk [vmem:[#allocation2 + $0x6f] sm:$0xff] %vm1214, %v1143
      %1228 = vst.msk [vmem:[#allocation2 + $0x77] sm:$0xff] %vm1214, %v1145
      %1229 = vst.msk [vmem:[#allocation2 + $0x7f] sm:$0xff] %vm1214, %v1147
      %1230 = vst.msk [vmem:[#allocation2 + $0x87] sm:$0xff] %vm1214, %v1149
      %1231 = vst.msk [vmem:[#allocation2 + $0x8f] sm:$0xff] %vm1214, %v1151
      %1232 = vst.msk [vmem:[#allocation2 + $0x97] sm:$0xff] %vm1214, %v1153
      %1233 = vst.msk [vmem:[#allocation2 + $0x9f] sm:$0xff] %vm1214, %v1155
      %1234 = vst.msk [vmem:[#allocation2 + $0xa7] sm:$0xff] %vm1214, %v1157
      %1235 = vst.msk [vmem:[#allocation2 + $0xaf] sm:$0xff] %vm1214, %v1159
      %1236 = vst.msk [vmem:[#allocation2 + $0xb7] sm:$0xff] %vm1214, %v1161
      %1237 = vst.msk [vmem:[#allocation2 + $0xbf] sm:$0xff] %vm1214, %v1163
      %1238 = vst.msk [vmem:[#allocation2 + $0xc7] sm:$0xff] %vm1214, %v1165
      %1239 = vst.msk [vmem:[#allocation2 + $0xcf] sm:$0xff] %vm1214, %v1167
      %1240 = vst.msk [vmem:[#allocation2 + $0xd7] sm:$0xff] %vm1214, %v1169
      %1241 = vst.msk [vmem:[#allocation2 + $0xdf] sm:$0xff] %vm1214, %v1171
      %1242 = vst.msk [vmem:[#allocation2 + $0xe7] sm:$0xff] %vm1214, %v1173
      %1243 = vst.msk [vmem:[#allocation2 + $0xef] sm:$0xff] %vm1214, %v1175
      %1244 = vst.msk [vmem:[#allocation2 + $0xf7] sm:$0xff] %vm1214, %v1177
      %1245 = vst.msk [vmem:[#allocation2 + $0xff] sm:$0xff] %vm1214, %v1179
      %1246 = vst.msk [vmem:[#allocation2 + $0x107] sm:$0xff] %vm1214, %v1181
      %v1247 = vld [vmem:[#allocation2] sm:$0xff]
      %v1248 = vld [vmem:[#allocation2 + $0x8] sm:$0xff]
      %v1249 = vld [vmem:[#allocation2 + $0x10] sm:$0xff]
      %v1250 = vld [vmem:[#allocation2 + $0x18] sm:$0xff]
      %v1251 = vld [vmem:[#allocation2 + $0x20] sm:$0xff]
      %v1252 = vld [vmem:[#allocation2 + $0x28] sm:$0xff]
      %v1253 = vld [vmem:[#allocation2 + $0x30] sm:$0xff]
      %v1254 = vld [vmem:[#allocation2 + $0x38] sm:$0xff]
      %v1255 = vld [vmem:[#allocation2 + $0x40] sm:$0xff]
      %v1256 = vld [vmem:[#allocation2 + $0x48] sm:$0xff]
      %v1257 = vld [vmem:[#allocation2 + $0x50] sm:$0xff]
      %v1258 = vld [vmem:[#allocation2 + $0x58] sm:$0xff]
      %v1259 = vld [vmem:[#allocation2 + $0x60] sm:$0xff]
      %v1260 = vld [vmem:[#allocation2 + $0x68] sm:$0xff]
      %v1261 = vld [vmem:[#allocation2 + $0x70] sm:$0xff]
      %v1262 = vld [vmem:[#allocation2 + $0x78] sm:$0xff]
      %v1263 = vld [vmem:[#allocation2 + $0x80] sm:$0xff]
      %v1264 = vld [vmem:[#allocation2 + $0x88] sm:$0xff]
      %v1265 = vld [vmem:[#allocation2 + $0x90] sm:$0xff]
      %v1266 = vld [vmem:[#allocation2 + $0x98] sm:$0xff]
      %v1267 = vld [vmem:[#allocation2 + $0xa0] sm:$0xff]
      %v1268 = vld [vmem:[#allocation2 + $0xa8] sm:$0xff]
      %v1269 = vld [vmem:[#allocation2 + $0xb0] sm:$0xff]
      %v1270 = vld [vmem:[#allocation2 + $0xb8] sm:$0xff]
      %v1271 = vld [vmem:[#allocation2 + $0xc0] sm:$0xff]
      %v1272 = vld [vmem:[#allocation2 + $0xc8] sm:$0xff]
      %v1273 = vld [vmem:[#allocation2 + $0xd0] sm:$0xff]
      %v1274 = vld [vmem:[#allocation2 + $0xd8] sm:$0xff]
      %v1275 = vld [vmem:[#allocation2 + $0xe0] sm:$0xff]
      %v1276 = vld [vmem:[#allocation2 + $0xe8] sm:$0xff]
      %v1277 = vld [vmem:[#allocation2 + $0xf0] sm:$0xff]
      %v1278 = vld [vmem:[#allocation2 + $0xf8] sm:$0xff]
      %v1279 = vpack.c.bf16 %v1248, %v1247
      %v1280 = vpack.c.bf16 %v1250, %v1249
      %v1281 = vpack.c.bf16 %v1252, %v1251
      %v1282 = vpack.c.bf16 %v1254, %v1253
      %v1283 = vpack.c.bf16 %v1256, %v1255
      %v1284 = vpack.c.bf16 %v1258, %v1257
      %v1285 = vpack.c.bf16 %v1260, %v1259
      %v1286 = vpack.c.bf16 %v1262, %v1261
      %v1287 = vpack.c.bf16 %v1264, %v1263
      %v1288 = vpack.c.bf16 %v1266, %v1265
      %v1289 = vpack.c.bf16 %v1268, %v1267
      %v1290 = vpack.c.bf16 %v1270, %v1269
      %v1291 = vpack.c.bf16 %v1272, %v1271
      %v1292 = vpack.c.bf16 %v1274, %v1273
      %v1293 = vpack.c.bf16 %v1276, %v1275
      %v1294 = vpack.c.bf16 %v1278, %v1277
      %v1295 = vld [vmem:[%s4] sm:$0x7]
      %v1296 = vld [vmem:[#allocation2 + $0x100] sm:$0xff]
      %v1297 = vld [vmem:[#allocation2 + $0x108] sm:$0xff]
      %v1298 = vpack.c.bf16 %v1297, %v1296
      %s1299 = scalar_lea.vmem %s4, 4
      %v1300 = vld [vmem:[%s1299] sm:$0x7]
      %v1302 = vsel %vm884, %v1280, 0
      %v1305 = vsel %vm884, %v1281, 0
      %v1308 = vsel %vm884, %v1282, 0
      %v1311 = vsel %vm884, %v1283, 0
      %v1314 = vsel %vm884, %v1284, 0
      %v1317 = vsel %vm884, %v1285, 0
      %v1320 = vsel %vm884, %v1286, 0
      %v1323 = vsel %vm884, %v1287, 0
      %v1326 = vsel %vm884, %v1288, 0
      %v1329 = vsel %vm884, %v1289, 0
      %v1332 = vsel %vm884, %v1290, 0
      %v1335 = vsel %vm884, %v1291, 0
      %v1338 = vsel %vm884, %v1292, 0
      %v1341 = vsel %vm884, %v1293, 0
      %v1344 = vsel %vm884, %v1294, 0
      %v1347 = vsel %vm884, %v1298, 0
      %vm1349 = vcmask 1042432
      %v1351 = vsel %vm1349, %v1300, 0
      %1353 = vmatprep.subr.bf16.mxu0 0
      %1354 = vmatpush1.bf16.msra.mxu0 %v1351
      %1355 = vmatprep.subr.bf16.mxu0 0
      %1356 = vmatpush1.bf16.msra.mxu0 0
      %1357 = vmatprep.subr.bf16.mxu0 0
      %1358 = vmatpush1.bf16.msra.mxu0 0
      %1359 = vmatprep.subr.bf16.mxu0 0
      %1360 = vmatpush1.bf16.msra.mxu0 0
      %1361 = vmatprep.subr.bf16.mxu0 0
      %1362 = vmatpush1.bf16.msra.mxu0 0
      %1363 = vmatprep.subr.bf16.mxu0 0
      %1364 = vmatpush1.bf16.msra.mxu0 0
      %1365 = vmatprep.subr.bf16.mxu0 0
      %1366 = vmatpush1.bf16.msra.mxu0 0
      %1367 = vmatprep.subr.bf16.mxu0 0
      %1368 = vmatpush1.bf16.msra.mxu0 0
      %1369 = vmatprep.subr.bf16.mxu0 0
      %1370 = vmatpush1.bf16.msra.mxu0 0
      %1371 = vmatprep.subr.bf16.mxu0 0
      %1372 = vmatpush1.bf16.msra.mxu0 0
      %1373 = vmatprep.subr.bf16.mxu0 0
      %1374 = vmatpush1.bf16.msra.mxu0 0
      %1375 = vmatprep.subr.bf16.mxu0 0
      %1376 = vmatpush1.bf16.msra.mxu0 0
      %1377 = vmatprep.subr.bf16.mxu0 0
      %1378 = vmatpush1.bf16.msra.mxu0 0
      %1379 = vmatprep.subr.bf16.mxu0 0
      %1380 = vmatpush1.bf16.msra.mxu0 0
      %1381 = vmatprep.subr.bf16.mxu0 0
      %1382 = vmatpush1.bf16.msra.mxu0 0
      %1383 = vmatprep.subr.bf16.mxu0 0
      %1384 = vmatpush1.bf16.msra.mxu0 0
      %1385 = vmatprep.mubr.bf16.mxu0 0
      %1386 = vmatmul.mubr.bf16.gmra.mrb[0].mxu0 %v1302
      %v1387 = vpop.f32.mrb[0].mxu0
      %v1388 = vadd.f32 0.0, %v1387
      %v1389 = vpop.f32.mrb[0].mxu0
      %v1390 = vpop.f32.mrb[0].mxu0
      %v1391 = vadd.f32 0.0, %v1390
      %v1392 = vpop.f32.mrb[0].mxu0
      %1393 = vmatprep.mubr.bf16.mxu0 0
      %1394 = vmatmul.mubr.bf16.gmra.mrb[0].mxu0 %v1305
      %v1395 = vpop.f32.mrb[0].mxu0
      %v1396 = vadd.f32 0.0, %v1395
      %v1397 = vpop.f32.mrb[0].mxu0
      %v1398 = vpop.f32.mrb[0].mxu0
      %v1399 = vadd.f32 0.0, %v1398
      %v1400 = vpop.f32.mrb[0].mxu0
      %1401 = vmatprep.mubr.bf16.mxu0 0
      %1402 = vmatmul.mubr.bf16.gmra.mrb[0].mxu0 %v1308
      %v1403 = vpop.f32.mrb[0].mxu0
      %v1404 = vadd.f32 0.0, %v1403
      %v1405 = vpop.f32.mrb[0].mxu0
      %v1406 = vpop.f32.mrb[0].mxu0
      %v1407 = vadd.f32 0.0, %v1406
      %v1408 = vpop.f32.mrb[0].mxu0
      %1409 = vmatprep.mubr.bf16.mxu0 0
      %1410 = vmatmul.mubr.bf16.gmra.mrb[0].mxu0 %v1311
      %v1411 = vpop.f32.mrb[0].mxu0
      %v1412 = vadd.f32 0.0, %v1411
      %v1413 = vpop.f32.mrb[0].mxu0
      %v1414 = vpop.f32.mrb[0].mxu0
      %v1415 = vadd.f32 0.0, %v1414
      %v1416 = vpop.f32.mrb[0].mxu0
      %1417 = vmatprep.mubr.bf16.mxu0 0
      %1418 = vmatmul.mubr.bf16.gmra.mrb[0].mxu0 %v1314
      %v1419 = vpop.f32.mrb[0].mxu0
      %v1420 = vadd.f32 0.0, %v1419
      %v1421 = vpop.f32.mrb[0].mxu0
      %v1422 = vpop.f32.mrb[0].mxu0
      %v1423 = vadd.f32 0.0, %v1422
      %v1424 = vpop.f32.mrb[0].mxu0
      %1425 = vmatprep.mubr.bf16.mxu0 0
      %1426 = vmatmul.mubr.bf16.gmra.mrb[0].mxu0 %v1317
      %v1427 = vpop.f32.mrb[0].mxu0
      %v1428 = vadd.f32 0.0, %v1427
      %v1429 = vpop.f32.mrb[0].mxu0
      %v1430 = vpop.f32.mrb[0].mxu0
      %v1431 = vadd.f32 0.0, %v1430
      %v1432 = vpop.f32.mrb[0].mxu0
      %1433 = vmatprep.mubr.bf16.mxu0 0
      %1434 = vmatmul.mubr.bf16.gmra.mrb[0].mxu0 %v1320
      %v1435 = vpop.f32.mrb[0].mxu0
      %v1436 = vadd.f32 0.0, %v1435
      %v1437 = vpop.f32.mrb[0].mxu0
      %v1438 = vpop.f32.mrb[0].mxu0
      %v1439 = vadd.f32 0.0, %v1438
      %v1440 = vpop.f32.mrb[0].mxu0
      %1441 = vmatprep.mubr.bf16.mxu0 0
      %1442 = vmatmul.mubr.bf16.gmra.mrb[0].mxu0 %v1323
      %v1443 = vpop.f32.mrb[0].mxu0
      %v1444 = vadd.f32 0.0, %v1443
      %v1445 = vpop.f32.mrb[0].mxu0
      %v1446 = vpop.f32.mrb[0].mxu0
      %v1447 = vadd.f32 0.0, %v1446
      %v1448 = vpop.f32.mrb[0].mxu0
      %1449 = vmatprep.mubr.bf16.mxu0 0
      %1450 = vmatmul.mubr.bf16.gmra.mrb[0].mxu0 %v1326
      %v1451 = vpop.f32.mrb[0].mxu0
      %v1452 = vadd.f32 0.0, %v1451
      %v1453 = vpop.f32.mrb[0].mxu0
      %v1454 = vpop.f32.mrb[0].mxu0
      %v1455 = vadd.f32 0.0, %v1454
      %v1456 = vpop.f32.mrb[0].mxu0
      %1457 = vmatprep.mubr.bf16.mxu0 0
      %1458 = vmatmul.mubr.bf16.gmra.mrb[0].mxu0 %v1329
      %v1459 = vpop.f32.mrb[0].mxu0
      %v1460 = vadd.f32 0.0, %v1459
      %v1461 = vpop.f32.mrb[0].mxu0
      %v1462 = vpop.f32.mrb[0].mxu0
      %v1463 = vadd.f32 0.0, %v1462
      %v1464 = vpop.f32.mrb[0].mxu0
      %1465 = vmatprep.mubr.bf16.mxu0 0
      %1466 = vmatmul.mubr.bf16.gmra.mrb[0].mxu0 %v1332
      %v1467 = vpop.f32.mrb[0].mxu0
      %v1468 = vadd.f32 0.0, %v1467
      %v1469 = vpop.f32.mrb[0].mxu0
      %v1470 = vpop.f32.mrb[0].mxu0
      %v1471 = vadd.f32 0.0, %v1470
      %v1472 = vpop.f32.mrb[0].mxu0
      %1473 = vmatprep.mubr.bf16.mxu0 0
      %1474 = vmatmul.mubr.bf16.gmra.mrb[0].mxu0 %v1335
      %v1475 = vpop.f32.mrb[0].mxu0
      %v1476 = vadd.f32 0.0, %v1475
      %v1477 = vpop.f32.mrb[0].mxu0
      %v1478 = vpop.f32.mrb[0].mxu0
      %v1479 = vadd.f32 0.0, %v1478
      %v1480 = vpop.f32.mrb[0].mxu0
      %1481 = vmatprep.mubr.bf16.mxu0 0
      %1482 = vmatmul.mubr.bf16.gmra.mrb[0].mxu0 %v1338
      %v1483 = vpop.f32.mrb[0].mxu0
      %v1484 = vadd.f32 0.0, %v1483
      %v1485 = vpop.f32.mrb[0].mxu0
      %v1486 = vpop.f32.mrb[0].mxu0
      %v1487 = vadd.f32 0.0, %v1486
      %v1488 = vpop.f32.mrb[0].mxu0
      %1489 = vmatprep.mubr.bf16.mxu0 0
      %1490 = vmatmul.mubr.bf16.gmra.mrb[0].mxu0 %v1341
      %v1491 = vpop.f32.mrb[0].mxu0
      %v1492 = vadd.f32 0.0, %v1491
      %v1493 = vpop.f32.mrb[0].mxu0
      %v1494 = vpop.f32.mrb[0].mxu0
      %v1495 = vadd.f32 0.0, %v1494
      %v1496 = vpop.f32.mrb[0].mxu0
      %1497 = vmatprep.mubr.bf16.mxu0 0
      %1498 = vmatmul.mubr.bf16.gmra.mrb[0].mxu0 %v1344
      %v1499 = vpop.f32.mrb[0].mxu0
      %v1500 = vadd.f32 0.0, %v1499
      %v1501 = vpop.f32.mrb[0].mxu0
      %v1502 = vpop.f32.mrb[0].mxu0
      %v1503 = vadd.f32 0.0, %v1502
      %v1504 = vpop.f32.mrb[0].mxu0
      %1505 = vmatprep.mubr.bf16.mxu0 0
      %1506 = vmatmul.mubr.bf16.gmra.mrb[0].mxu0 %v1347
      %v1507 = vpop.f32.mrb[0].mxu0
      %v1508 = vadd.f32 0.0, %v1507
      %v1509 = vpop.f32.mrb[0].mxu0
      %v1510 = vpop.f32.mrb[0].mxu0
      %v1511 = vadd.f32 0.0, %v1510
      %v1512 = vpop.f32.mrb[0].mxu0
      %1513 = vdwg.mxu0
      %v1515 = vsel %vm884, %v1279, 0
      %v1518 = vsel %vm1349, %v1295, 0
      %1520 = vmatprep.subr.bf16.mxu0 0
      %1521 = vmatpush1.bf16.msra.mxu0 %v1518
      %1522 = vmatprep.subr.bf16.mxu0 0
      %1523 = vmatpush1.bf16.msra.mxu0 0
      %1524 = vmatprep.subr.bf16.mxu0 0
      %1525 = vmatpush1.bf16.msra.mxu0 0
      %1526 = vmatprep.subr.bf16.mxu0 0
      %1527 = vmatpush1.bf16.msra.mxu0 0
      %1528 = vmatprep.subr.bf16.mxu0 0
      %1529 = vmatpush1.bf16.msra.mxu0 0
      %1530 = vmatprep.subr.bf16.mxu0 0
      %1531 = vmatpush1.bf16.msra.mxu0 0
      %1532 = vmatprep.subr.bf16.mxu0 0
      %1533 = vmatpush1.bf16.msra.mxu0 0
      %1534 = vmatprep.subr.bf16.mxu0 0
      %1535 = vmatpush1.bf16.msra.mxu0 0
      %1536 = vmatprep.subr.bf16.mxu0 0
      %1537 = vmatpush1.bf16.msra.mxu0 0
      %1538 = vmatprep.subr.bf16.mxu0 0
      %1539 = vmatpush1.bf16.msra.mxu0 0
      %1540 = vmatprep.subr.bf16.mxu0 0
      %1541 = vmatpush1.bf16.msra.mxu0 0
      %1542 = vmatprep.subr.bf16.mxu0 0
      %1543 = vmatpush1.bf16.msra.mxu0 0
      %1544 = vmatprep.subr.bf16.mxu0 0
      %1545 = vmatpush1.bf16.msra.mxu0 0
      %1546 = vmatprep.subr.bf16.mxu0 0
      %1547 = vmatpush1.bf16.msra.mxu0 0
      %1548 = vmatprep.subr.bf16.mxu0 0
      %1549 = vmatpush1.bf16.msra.mxu0 0
      %1550 = vmatprep.subr.bf16.mxu0 0
      %1551 = vmatpush1.bf16.msra.mxu0 0
      %1552 = vmatprep.mubr.bf16.mxu0 0
      %1553 = vmatmul.mubr.bf16.gmra.mrb[0].mxu0 %v1515
      %v1554 = vpop.f32.mrb[0].mxu0
      %v1555 = vadd.f32 %v1388, %v1554
      %v1556 = vpop.f32.mrb[0].mxu0
      %v1557 = vpop.f32.mrb[0].mxu0
      %v1558 = vadd.f32 %v1391, %v1557
      %v1559 = vpop.f32.mrb[0].mxu0
      %1560 = vmatprep.mubr.bf16.mxu0 0
      %1561 = vmatmul.mubr.bf16.gmra.mrb[0].mxu0 %v1302
      %v1562 = vpop.f32.mrb[0].mxu0
      %v1563 = vadd.f32 %v1396, %v1562
      %v1564 = vpop.f32.mrb[0].mxu0
      %v1565 = vpop.f32.mrb[0].mxu0
      %v1566 = vadd.f32 %v1399, %v1565
      %v1567 = vpop.f32.mrb[0].mxu0
      %1568 = vmatprep.mubr.bf16.mxu0 0
      %1569 = vmatmul.mubr.bf16.gmra.mrb[0].mxu0 %v1305
      %v1570 = vpop.f32.mrb[0].mxu0
      %v1571 = vadd.f32 %v1404, %v1570
      %v1572 = vpop.f32.mrb[0].mxu0
      %v1573 = vpop.f32.mrb[0].mxu0
      %v1574 = vadd.f32 %v1407, %v1573
      %v1575 = vpop.f32.mrb[0].mxu0
      %1576 = vmatprep.mubr.bf16.mxu0 0
      %1577 = vmatmul.mubr.bf16.gmra.mrb[0].mxu0 %v1308
      %v1578 = vpop.f32.mrb[0].mxu0
      %v1579 = vadd.f32 %v1412, %v1578
      %v1580 = vpop.f32.mrb[0].mxu0
      %v1581 = vpop.f32.mrb[0].mxu0
      %v1582 = vadd.f32 %v1415, %v1581
      %v1583 = vpop.f32.mrb[0].mxu0
      %1584 = vmatprep.mubr.bf16.mxu0 0
      %1585 = vmatmul.mubr.bf16.gmra.mrb[0].mxu0 %v1311
      %v1586 = vpop.f32.mrb[0].mxu0
      %v1587 = vadd.f32 %v1420, %v1586
      %v1588 = vpop.f32.mrb[0].mxu0
      %v1589 = vpop.f32.mrb[0].mxu0
      %v1590 = vadd.f32 %v1423, %v1589
      %v1591 = vpop.f32.mrb[0].mxu0
      %1592 = vmatprep.mubr.bf16.mxu0 0
      %1593 = vmatmul.mubr.bf16.gmra.mrb[0].mxu0 %v1314
      %v1594 = vpop.f32.mrb[0].mxu0
      %v1595 = vadd.f32 %v1428, %v1594
      %v1596 = vpop.f32.mrb[0].mxu0
      %v1597 = vpop.f32.mrb[0].mxu0
      %v1598 = vadd.f32 %v1431, %v1597
      %v1599 = vpop.f32.mrb[0].mxu0
      %1600 = vmatprep.mubr.bf16.mxu0 0
      %1601 = vmatmul.mubr.bf16.gmra.mrb[0].mxu0 %v1317
      %v1602 = vpop.f32.mrb[0].mxu0
      %v1603 = vadd.f32 %v1436, %v1602
      %v1604 = vpop.f32.mrb[0].mxu0
      %v1605 = vpop.f32.mrb[0].mxu0
      %v1606 = vadd.f32 %v1439, %v1605
      %v1607 = vpop.f32.mrb[0].mxu0
      %1608 = vmatprep.mubr.bf16.mxu0 0
      %1609 = vmatmul.mubr.bf16.gmra.mrb[0].mxu0 %v1320
      %v1610 = vpop.f32.mrb[0].mxu0
      %v1611 = vadd.f32 %v1444, %v1610
      %v1612 = vpop.f32.mrb[0].mxu0
      %v1613 = vpop.f32.mrb[0].mxu0
      %v1614 = vadd.f32 %v1447, %v1613
      %v1615 = vpop.f32.mrb[0].mxu0
      %1616 = vmatprep.mubr.bf16.mxu0 0
      %1617 = vmatmul.mubr.bf16.gmra.mrb[0].mxu0 %v1323
      %v1618 = vpop.f32.mrb[0].mxu0
      %v1619 = vadd.f32 %v1452, %v1618
      %v1620 = vpop.f32.mrb[0].mxu0
      %v1621 = vpop.f32.mrb[0].mxu0
      %v1622 = vadd.f32 %v1455, %v1621
      %v1623 = vpop.f32.mrb[0].mxu0
      %1624 = vmatprep.mubr.bf16.mxu0 0
      %1625 = vmatmul.mubr.bf16.gmra.mrb[0].mxu0 %v1326
      %v1626 = vpop.f32.mrb[0].mxu0
      %v1627 = vadd.f32 %v1460, %v1626
      %v1628 = vpop.f32.mrb[0].mxu0
      %v1629 = vpop.f32.mrb[0].mxu0
      %v1630 = vadd.f32 %v1463, %v1629
      %v1631 = vpop.f32.mrb[0].mxu0
      %1632 = vmatprep.mubr.bf16.mxu0 0
      %1633 = vmatmul.mubr.bf16.gmra.mrb[0].mxu0 %v1329
      %v1634 = vpop.f32.mrb[0].mxu0
      %v1635 = vadd.f32 %v1468, %v1634
      %v1636 = vpop.f32.mrb[0].mxu0
      %v1637 = vpop.f32.mrb[0].mxu0
      %v1638 = vadd.f32 %v1471, %v1637
      %v1639 = vpop.f32.mrb[0].mxu0
      %1640 = vmatprep.mubr.bf16.mxu0 0
      %1641 = vmatmul.mubr.bf16.gmra.mrb[0].mxu0 %v1332
      %v1642 = vpop.f32.mrb[0].mxu0
      %v1643 = vadd.f32 %v1476, %v1642
      %v1644 = vpop.f32.mrb[0].mxu0
      %v1645 = vpop.f32.mrb[0].mxu0
      %v1646 = vadd.f32 %v1479, %v1645
      %v1647 = vpop.f32.mrb[0].mxu0
      %1648 = vmatprep.mubr.bf16.mxu0 0
      %1649 = vmatmul.mubr.bf16.gmra.mrb[0].mxu0 %v1335
      %v1650 = vpop.f32.mrb[0].mxu0
      %v1651 = vadd.f32 %v1484, %v1650
      %v1652 = vpop.f32.mrb[0].mxu0
      %v1653 = vpop.f32.mrb[0].mxu0
      %v1654 = vadd.f32 %v1487, %v1653
      %v1655 = vpop.f32.mrb[0].mxu0
      %1656 = vmatprep.mubr.bf16.mxu0 0
      %1657 = vmatmul.mubr.bf16.gmra.mrb[0].mxu0 %v1338
      %v1658 = vpop.f32.mrb[0].mxu0
      %v1659 = vadd.f32 %v1492, %v1658
      %v1660 = vpop.f32.mrb[0].mxu0
      %v1661 = vpop.f32.mrb[0].mxu0
      %v1662 = vadd.f32 %v1495, %v1661
      %v1663 = vpop.f32.mrb[0].mxu0
      %1664 = vmatprep.mubr.bf16.mxu0 0
      %1665 = vmatmul.mubr.bf16.gmra.mrb[0].mxu0 %v1341
      %v1666 = vpop.f32.mrb[0].mxu0
      %v1667 = vadd.f32 %v1500, %v1666
      %v1668 = vpop.f32.mrb[0].mxu0
      %v1669 = vpop.f32.mrb[0].mxu0
      %v1670 = vadd.f32 %v1503, %v1669
      %v1671 = vpop.f32.mrb[0].mxu0
      %1672 = vmatprep.mubr.bf16.mxu0 0
      %1673 = vmatmul.mubr.bf16.gmra.mrb[0].mxu0 %v1344
      %v1674 = vpop.f32.mrb[0].mxu0
      %v1675 = vadd.f32 %v1508, %v1674
      %v1676 = vpop.f32.mrb[0].mxu0
      %v1677 = vpop.f32.mrb[0].mxu0
      %v1678 = vadd.f32 %v1511, %v1677
      %v1679 = vpop.f32.mrb[0].mxu0
      %1680 = vdwg.mxu0
      %v1681 = vld [vmem:[#allocation2 + $0x20] sm:$0xff]
      %v1682 = vld [vmem:[#allocation2 + $0x28] sm:$0xff]
      %v1683 = vld [vmem:[#allocation2 + $0x30] sm:$0xff]
      %v1684 = vld [vmem:[#allocation2 + $0x38] sm:$0xff]
      %v1685 = vld [vmem:[#allocation2 + $0x40] sm:$0xff]
      %v1686 = vld [vmem:[#allocation2 + $0x48] sm:$0xff]
      %v1687 = vld [vmem:[#allocation2 + $0x50] sm:$0xff]
      %v1688 = vld [vmem:[#allocation2 + $0x58] sm:$0xff]
      %v1689 = vld [vmem:[#allocation2 + $0x60] sm:$0xff]
      %v1690 = vld [vmem:[#allocation2 + $0x68] sm:$0xff]
      %v1691 = vld [vmem:[#allocation2 + $0x70] sm:$0xff]
      %v1692 = vld [vmem:[#allocation2 + $0x78] sm:$0xff]
      %v1693 = vld [vmem:[#allocation2 + $0x80] sm:$0xff]
      %v1694 = vld [vmem:[#allocation2 + $0x88] sm:$0xff]
      %v1695 = vld [vmem:[#allocation2 + $0x90] sm:$0xff]
      %v1696 = vld [vmem:[#allocation2 + $0x98] sm:$0xff]
      %v1697 = vld [vmem:[#allocation2 + $0xa0] sm:$0xff]
      %v1698 = vld [vmem:[#allocation2 + $0xa8] sm:$0xff]
      %v1699 = vld [vmem:[#allocation2 + $0xb0] sm:$0xff]
      %v1700 = vld [vmem:[#allocation2 + $0xb8] sm:$0xff]
      %v1701 = vld [vmem:[#allocation2 + $0xc0] sm:$0xff]
      %v1702 = vld [vmem:[#allocation2 + $0xc8] sm:$0xff]
      %v1703 = vld [vmem:[#allocation2 + $0xd0] sm:$0xff]
      %v1704 = vld [vmem:[#allocation2 + $0xd8] sm:$0xff]
      %v1705 = vld [vmem:[#allocation2 + $0xe0] sm:$0xff]
      %v1706 = vld [vmem:[#allocation2 + $0xe8] sm:$0xff]
      %v1707 = vld [vmem:[#allocation2 + $0xf0] sm:$0xff]
      %v1708 = vld [vmem:[#allocation2 + $0xf8] sm:$0xff]
      %v1709 = vld [vmem:[#allocation2 + $0x100] sm:$0xff]
      %v1710 = vld [vmem:[#allocation2 + $0x108] sm:$0xff]
      %v1711 = vld [vmem:[#allocation2 + $0x110] sm:$0xff]
      %v1712 = vld [vmem:[#allocation2 + $0x118] sm:$0xff]
      %v1713 = vpack.c.bf16 %v1682, %v1681
      %v1714 = vpack.c.bf16 %v1684, %v1683
      %v1715 = vpack.c.bf16 %v1686, %v1685
      %v1716 = vpack.c.bf16 %v1688, %v1687
      %v1717 = vpack.c.bf16 %v1690, %v1689
      %v1718 = vpack.c.bf16 %v1692, %v1691
      %v1719 = vpack.c.bf16 %v1694, %v1693
      %v1720 = vpack.c.bf16 %v1696, %v1695
      %v1721 = vpack.c.bf16 %v1698, %v1697
      %v1722 = vpack.c.bf16 %v1700, %v1699
      %v1723 = vpack.c.bf16 %v1702, %v1701
      %v1724 = vpack.c.bf16 %v1704, %v1703
      %v1725 = vpack.c.bf16 %v1706, %v1705
      %v1726 = vpack.c.bf16 %v1708, %v1707
      %v1727 = vpack.c.bf16 %v1710, %v1709
      %v1728 = vpack.c.bf16 %v1712, %v1711
      %s1729 = scalar_lea.vmem %s4, 8
      %v1730 = vld [vmem:[%s1729] sm:$0x7]
      %v1732 = vsel %vm884, %v1713, 0
      %v1735 = vsel %vm884, %v1714, 0
      %v1738 = vsel %vm884, %v1715, 0
      %v1741 = vsel %vm884, %v1716, 0
      %v1744 = vsel %vm884, %v1717, 0
      %v1747 = vsel %vm884, %v1718, 0
      %v1750 = vsel %vm884, %v1719, 0
      %v1753 = vsel %vm884, %v1720, 0
      %v1756 = vsel %vm884, %v1721, 0
      %v1759 = vsel %vm884, %v1722, 0
      %v1762 = vsel %vm884, %v1723, 0
      %v1765 = vsel %vm884, %v1724, 0
      %v1768 = vsel %vm884, %v1725, 0
      %v1771 = vsel %vm884, %v1726, 0
      %v1774 = vsel %vm884, %v1727, 0
      %v1777 = vsel %vm884, %v1728, 0
      %v1780 = vsel %vm1349, %v1730, 0
      %1782 = vmatprep.subr.bf16.mxu0 0
      %1783 = vmatpush1.bf16.msra.mxu0 %v1780
      %1784 = vmatprep.subr.bf16.mxu0 0
      %1785 = vmatpush1.bf16.msra.mxu0 0
      %1786 = vmatprep.subr.bf16.mxu0 0
      %1787 = vmatpush1.bf16.msra.mxu0 0
      %1788 = vmatprep.subr.bf16.mxu0 0
      %1789 = vmatpush1.bf16.msra.mxu0 0
      %1790 = vmatprep.subr.bf16.mxu0 0
      %1791 = vmatpush1.bf16.msra.mxu0 0
      %1792 = vmatprep.subr.bf16.mxu0 0
      %1793 = vmatpush1.bf16.msra.mxu0 0
      %1794 = vmatprep.subr.bf16.mxu0 0
      %1795 = vmatpush1.bf16.msra.mxu0 0
      %1796 = vmatprep.subr.bf16.mxu0 0
      %1797 = vmatpush1.bf16.msra.mxu0 0
      %1798 = vmatprep.subr.bf16.mxu0 0
      %1799 = vmatpush1.bf16.msra.mxu0 0
      %1800 = vmatprep.subr.bf16.mxu0 0
      %1801 = vmatpush1.bf16.msra.mxu0 0
      %1802 = vmatprep.subr.bf16.mxu0 0
      %1803 = vmatpush1.bf16.msra.mxu0 0
      %1804 = vmatprep.subr.bf16.mxu0 0
      %1805 = vmatpush1.bf16.msra.mxu0 0
      %1806 = vmatprep.subr.bf16.mxu0 0
      %1807 = vmatpush1.bf16.msra.mxu0 0
      %1808 = vmatprep.subr.bf16.mxu0 0
      %1809 = vmatpush1.bf16.msra.mxu0 0
      %1810 = vmatprep.subr.bf16.mxu0 0
      %1811 = vmatpush1.bf16.msra.mxu0 0
      %1812 = vmatprep.subr.bf16.mxu0 0
      %1813 = vmatpush1.bf16.msra.mxu0 0
      %1814 = vmatprep.mubr.bf16.mxu0 0
      %1815 = vmatmul.mubr.bf16.gmra.mrb[0].mxu0 %v1732
      %v1816 = vpop.f32.mrb[0].mxu0
      %v1817 = vadd.f32 0.0, %v1816
      %v1818 = vpop.f32.mrb[0].mxu0
      %v1819 = vpop.f32.mrb[0].mxu0
      %v1820 = vadd.f32 0.0, %v1819
      %v1821 = vpop.f32.mrb[0].mxu0
      %1822 = vmatprep.mubr.bf16.mxu0 0
      %1823 = vmatmul.mubr.bf16.gmra.mrb[0].mxu0 %v1735
      %v1824 = vpop.f32.mrb[0].mxu0
      %v1825 = vadd.f32 0.0, %v1824
      %v1826 = vpop.f32.mrb[0].mxu0
      %v1827 = vpop.f32.mrb[0].mxu0
      %v1828 = vadd.f32 0.0, %v1827
      %v1829 = vpop.f32.mrb[0].mxu0
      %1830 = vmatprep.mubr.bf16.mxu0 0
      %1831 = vmatmul.mubr.bf16.gmra.mrb[0].mxu0 %v1738
      %v1832 = vpop.f32.mrb[0].mxu0
      %v1833 = vadd.f32 0.0, %v1832
      %v1834 = vpop.f32.mrb[0].mxu0
      %v1835 = vpop.f32.mrb[0].mxu0
      %v1836 = vadd.f32 0.0, %v1835
      %v1837 = vpop.f32.mrb[0].mxu0
      %1838 = vmatprep.mubr.bf16.mxu0 0
      %1839 = vmatmul.mubr.bf16.gmra.mrb[0].mxu0 %v1741
      %v1840 = vpop.f32.mrb[0].mxu0
      %v1841 = vadd.f32 0.0, %v1840
      %v1842 = vpop.f32.mrb[0].mxu0
      %v1843 = vpop.f32.mrb[0].mxu0
      %v1844 = vadd.f32 0.0, %v1843
      %v1845 = vpop.f32.mrb[0].mxu0
      %1846 = vmatprep.mubr.bf16.mxu0 0
      %1847 = vmatmul.mubr.bf16.gmra.mrb[0].mxu0 %v1744
      %v1848 = vpop.f32.mrb[0].mxu0
      %v1849 = vadd.f32 0.0, %v1848
      %v1850 = vpop.f32.mrb[0].mxu0
      %v1851 = vpop.f32.mrb[0].mxu0
      %v1852 = vadd.f32 0.0, %v1851
      %v1853 = vpop.f32.mrb[0].mxu0
      %1854 = vmatprep.mubr.bf16.mxu0 0
      %1855 = vmatmul.mubr.bf16.gmra.mrb[0].mxu0 %v1747
      %v1856 = vpop.f32.mrb[0].mxu0
      %v1857 = vadd.f32 0.0, %v1856
      %v1858 = vpop.f32.mrb[0].mxu0
      %v1859 = vpop.f32.mrb[0].mxu0
      %v1860 = vadd.f32 0.0, %v1859
      %v1861 = vpop.f32.mrb[0].mxu0
      %1862 = vmatprep.mubr.bf16.mxu0 0
      %1863 = vmatmul.mubr.bf16.gmra.mrb[0].mxu0 %v1750
      %v1864 = vpop.f32.mrb[0].mxu0
      %v1865 = vadd.f32 0.0, %v1864
      %v1866 = vpop.f32.mrb[0].mxu0
      %v1867 = vpop.f32.mrb[0].mxu0
      %v1868 = vadd.f32 0.0, %v1867
      %v1869 = vpop.f32.mrb[0].mxu0
      %1870 = vmatprep.mubr.bf16.mxu0 0
      %1871 = vmatmul.mubr.bf16.gmra.mrb[0].mxu0 %v1753
      %v1872 = vpop.f32.mrb[0].mxu0
      %v1873 = vadd.f32 0.0, %v1872
      %v1874 = vpop.f32.mrb[0].mxu0
      %v1875 = vpop.f32.mrb[0].mxu0
      %v1876 = vadd.f32 0.0, %v1875
      %v1877 = vpop.f32.mrb[0].mxu0
      %1878 = vmatprep.mubr.bf16.mxu0 0
      %1879 = vmatmul.mubr.bf16.gmra.mrb[0].mxu0 %v1756
      %v1880 = vpop.f32.mrb[0].mxu0
      %v1881 = vadd.f32 0.0, %v1880
      %v1882 = vpop.f32.mrb[0].mxu0
      %v1883 = vpop.f32.mrb[0].mxu0
      %v1884 = vadd.f32 0.0, %v1883
      %v1885 = vpop.f32.mrb[0].mxu0
      %1886 = vmatprep.mubr.bf16.mxu0 0
      %1887 = vmatmul.mubr.bf16.gmra.mrb[0].mxu0 %v1759
      %v1888 = vpop.f32.mrb[0].mxu0
      %v1889 = vadd.f32 0.0, %v1888
      %v1890 = vpop.f32.mrb[0].mxu0
      %v1891 = vpop.f32.mrb[0].mxu0
      %v1892 = vadd.f32 0.0, %v1891
      %v1893 = vpop.f32.mrb[0].mxu0
      %1894 = vmatprep.mubr.bf16.mxu0 0
      %1895 = vmatmul.mubr.bf16.gmra.mrb[0].mxu0 %v1762
      %v1896 = vpop.f32.mrb[0].mxu0
      %v1897 = vadd.f32 0.0, %v1896
      %v1898 = vpop.f32.mrb[0].mxu0
      %v1899 = vpop.f32.mrb[0].mxu0
      %v1900 = vadd.f32 0.0, %v1899
      %v1901 = vpop.f32.mrb[0].mxu0
      %1902 = vmatprep.mubr.bf16.mxu0 0
      %1903 = vmatmul.mubr.bf16.gmra.mrb[0].mxu0 %v1765
      %v1904 = vpop.f32.mrb[0].mxu0
      %v1905 = vadd.f32 0.0, %v1904
      %v1906 = vpop.f32.mrb[0].mxu0
      %v1907 = vpop.f32.mrb[0].mxu0
      %v1908 = vadd.f32 0.0, %v1907
      %v1909 = vpop.f32.mrb[0].mxu0
      %1910 = vmatprep.mubr.bf16.mxu0 0
      %1911 = vmatmul.mubr.bf16.gmra.mrb[0].mxu0 %v1768
      %v1912 = vpop.f32.mrb[0].mxu0
      %v1913 = vadd.f32 0.0, %v1912
      %v1914 = vpop.f32.mrb[0].mxu0
      %v1915 = vpop.f32.mrb[0].mxu0
      %v1916 = vadd.f32 0.0, %v1915
      %v1917 = vpop.f32.mrb[0].mxu0
      %1918 = vmatprep.mubr.bf16.mxu0 0
      %1919 = vmatmul.mubr.bf16.gmra.mrb[0].mxu0 %v1771
      %v1920 = vpop.f32.mrb[0].mxu0
      %v1921 = vadd.f32 0.0, %v1920
      %v1922 = vpop.f32.mrb[0].mxu0
      %v1923 = vpop.f32.mrb[0].mxu0
      %v1924 = vadd.f32 0.0, %v1923
      %v1925 = vpop.f32.mrb[0].mxu0
      %1926 = vmatprep.mubr.bf16.mxu0 0
      %1927 = vmatmul.mubr.bf16.gmra.mrb[0].mxu0 %v1774
      %v1928 = vpop.f32.mrb[0].mxu0
      %v1929 = vadd.f32 0.0, %v1928
      %v1930 = vpop.f32.mrb[0].mxu0
      %v1931 = vpop.f32.mrb[0].mxu0
      %v1932 = vadd.f32 0.0, %v1931
      %v1933 = vpop.f32.mrb[0].mxu0
      %1934 = vmatprep.mubr.bf16.mxu0 0
      %1935 = vmatmul.mubr.bf16.gmra.mrb[0].mxu0 %v1777
      %v1936 = vpop.f32.mrb[0].mxu0
      %v1937 = vadd.f32 0.0, %v1936
      %v1938 = vpop.f32.mrb[0].mxu0
      %v1939 = vpop.f32.mrb[0].mxu0
      %v1940 = vadd.f32 0.0, %v1939
      %v1941 = vpop.f32.mrb[0].mxu0
      %1942 = vdwg.mxu0
      %v1943 = vadd.f32 %v1555, %v1817
      %v1944 = vadd.f32 %v1558, %v1820
      %v1945 = vadd.f32 %v1563, %v1825
      %v1946 = vadd.f32 %v1566, %v1828
      %v1947 = vadd.f32 %v1571, %v1833
      %v1948 = vadd.f32 %v1574, %v1836
      %v1949 = vadd.f32 %v1579, %v1841
      %v1950 = vadd.f32 %v1582, %v1844
      %v1951 = vadd.f32 %v1587, %v1849
      %v1952 = vadd.f32 %v1590, %v1852
      %v1953 = vadd.f32 %v1595, %v1857
      %v1954 = vadd.f32 %v1598, %v1860
      %v1955 = vadd.f32 %v1603, %v1865
      %v1956 = vadd.f32 %v1606, %v1868
      %v1957 = vadd.f32 %v1611, %v1873
      %v1958 = vadd.f32 %v1614, %v1876
      %v1959 = vadd.f32 %v1619, %v1881
      %v1960 = vadd.f32 %v1622, %v1884
      %v1961 = vadd.f32 %v1627, %v1889
      %v1962 = vadd.f32 %v1630, %v1892
      %v1963 = vadd.f32 %v1635, %v1897
      %v1964 = vadd.f32 %v1638, %v1900
      %v1965 = vadd.f32 %v1643, %v1905
      %v1966 = vadd.f32 %v1646, %v1908
      %v1967 = vadd.f32 %v1651, %v1913
      %v1968 = vadd.f32 %v1654, %v1916
      %v1969 = vadd.f32 %v1659, %v1921
      %v1970 = vadd.f32 %v1662, %v1924
      %v1971 = vadd.f32 %v1667, %v1929
      %v1972 = vadd.f32 %v1670, %v1932
      %v1973 = vadd.f32 %v1675, %v1937
      %v1974 = vadd.f32 %v1678, %v1940
      %v1975 = vld [vmem:[%s5] sm:$0x1]
      %v1977 = vlaneseq
      %v1978 = vshrl.u32 %v1977, 7
      %v1979 = vsub.s32 0, %v1978
      %v1980 = vrot.slane %v1975, %v1979
      %v1982 = vmul.f32 %v1943, %v1980
      %v1983 = vmul.f32 %v1944, %v1980
      %v1984 = vmul.f32 %v1945, %v1980
      %v1985 = vmul.f32 %v1946, %v1980
      %v1986 = vmul.f32 %v1947, %v1980
      %v1987 = vmul.f32 %v1948, %v1980
      %v1988 = vmul.f32 %v1949, %v1980
      %v1989 = vmul.f32 %v1950, %v1980
      %v1990 = vmul.f32 %v1951, %v1980
      %v1991 = vmul.f32 %v1952, %v1980
      %v1992 = vmul.f32 %v1953, %v1980
      %v1993 = vmul.f32 %v1954, %v1980
      %v1994 = vmul.f32 %v1955, %v1980
      %v1995 = vmul.f32 %v1956, %v1980
      %v1996 = vmul.f32 %v1957, %v1980
      %v1997 = vmul.f32 %v1958, %v1980
      %v1998 = vmul.f32 %v1959, %v1980
      %v1999 = vmul.f32 %v1960, %v1980
      %v2000 = vmul.f32 %v1961, %v1980
      %v2001 = vmul.f32 %v1962, %v1980
      %v2002 = vmul.f32 %v1963, %v1980
      %v2003 = vmul.f32 %v1964, %v1980
      %v2004 = vmul.f32 %v1965, %v1980
      %v2005 = vmul.f32 %v1966, %v1980
      %v2006 = vmul.f32 %v1967, %v1980
      %v2007 = vmul.f32 %v1968, %v1980
      %v2008 = vmul.f32 %v1969, %v1980
      %v2009 = vmul.f32 %v1970, %v1980
      %v2010 = vmul.f32 %v1971, %v1980
      %v2011 = vmul.f32 %v1972, %v1980
      %v2012 = vmul.f32 %v1973, %v1980
      %v2013 = vmul.f32 %v1974, %v1980
      %v2014 = vld [vmem:[%s6] sm:$0x1]
      %v2016 = vlaneseq
      %v2017 = vshrl.u32 %v2016, 7
      %v2018 = vsub.s32 0, %v2017
      %v2019 = vrot.slane %v2014, %v2018
      %v2021 = vadd.f32 %v1982, %v2019
      %v2022 = vadd.f32 %v1983, %v2019
      %v2023 = vadd.f32 %v1984, %v2019
      %v2024 = vadd.f32 %v1985, %v2019
      %v2025 = vadd.f32 %v1986, %v2019
      %v2026 = vadd.f32 %v1987, %v2019
      %v2027 = vadd.f32 %v1988, %v2019
      %v2028 = vadd.f32 %v1989, %v2019
      %v2029 = vadd.f32 %v1990, %v2019
      %v2030 = vadd.f32 %v1991, %v2019
      %v2031 = vadd.f32 %v1992, %v2019
      %v2032 = vadd.f32 %v1993, %v2019
      %v2033 = vadd.f32 %v1994, %v2019
      %v2034 = vadd.f32 %v1995, %v2019
      %v2035 = vadd.f32 %v1996, %v2019
      %v2036 = vadd.f32 %v1997, %v2019
      %v2037 = vadd.f32 %v1998, %v2019
      %v2038 = vadd.f32 %v1999, %v2019
      %v2039 = vadd.f32 %v2000, %v2019
      %v2040 = vadd.f32 %v2001, %v2019
      %v2041 = vadd.f32 %v2002, %v2019
      %v2042 = vadd.f32 %v2003, %v2019
      %v2043 = vadd.f32 %v2004, %v2019
      %v2044 = vadd.f32 %v2005, %v2019
      %v2045 = vadd.f32 %v2006, %v2019
      %v2046 = vadd.f32 %v2007, %v2019
      %v2047 = vadd.f32 %v2008, %v2019
      %v2048 = vadd.f32 %v2009, %v2019
      %v2049 = vadd.f32 %v2010, %v2019
      %v2050 = vadd.f32 %v2011, %v2019
      %v2051 = vadd.f32 %v2012, %v2019
      %v2052 = vadd.f32 %v2013, %v2019
      %v2053 = vsub.f32 0.0, %v2021
      %v2054 = vsub.f32 0.0, %v2022
      %v2055 = vsub.f32 0.0, %v2023
      %v2056 = vsub.f32 0.0, %v2024
      %v2057 = vsub.f32 0.0, %v2025
      %v2058 = vsub.f32 0.0, %v2026
      %v2059 = vsub.f32 0.0, %v2027
      %v2060 = vsub.f32 0.0, %v2028
      %v2061 = vsub.f32 0.0, %v2029
      %v2062 = vsub.f32 0.0, %v2030
      %v2063 = vsub.f32 0.0, %v2031
      %v2064 = vsub.f32 0.0, %v2032
      %v2065 = vsub.f32 0.0, %v2033
      %v2066 = vsub.f32 0.0, %v2034
      %v2067 = vsub.f32 0.0, %v2035
      %v2068 = vsub.f32 0.0, %v2036
      %v2069 = vsub.f32 0.0, %v2037
      %v2070 = vsub.f32 0.0, %v2038
      %v2071 = vsub.f32 0.0, %v2039
      %v2072 = vsub.f32 0.0, %v2040
      %v2073 = vsub.f32 0.0, %v2041
      %v2074 = vsub.f32 0.0, %v2042
      %v2075 = vsub.f32 0.0, %v2043
      %v2076 = vsub.f32 0.0, %v2044
      %v2077 = vsub.f32 0.0, %v2045
      %v2078 = vsub.f32 0.0, %v2046
      %v2079 = vsub.f32 0.0, %v2047
      %v2080 = vsub.f32 0.0, %v2048
      %v2081 = vsub.f32 0.0, %v2049
      %v2082 = vsub.f32 0.0, %v2050
      %v2083 = vsub.f32 0.0, %v2051
      %v2084 = vsub.f32 0.0, %v2052
      %v2085 = vmul.f32 %v2053, 1.442695
      %v2086 = vpow.pop %v2085
      %v2087 = vmul.f32 %v2054, 1.442695
      %v2088 = vpow.pop %v2087
      %v2089 = vmul.f32 %v2055, 1.442695
      %v2090 = vpow.pop %v2089
      %v2091 = vmul.f32 %v2056, 1.442695
      %v2092 = vpow.pop %v2091
      %v2093 = vmul.f32 %v2057, 1.442695
      %v2094 = vpow.pop %v2093
      %v2095 = vmul.f32 %v2058, 1.442695
      %v2096 = vpow.pop %v2095
      %v2097 = vmul.f32 %v2059, 1.442695
      %v2098 = vpow.pop %v2097
      %v2099 = vmul.f32 %v2060, 1.442695
      %v2100 = vpow.pop %v2099
      %v2101 = vmul.f32 %v2061, 1.442695
      %v2102 = vpow.pop %v2101
      %v2103 = vmul.f32 %v2062, 1.442695
      %v2104 = vpow.pop %v2103
      %v2105 = vmul.f32 %v2063, 1.442695
      %v2106 = vpow.pop %v2105
      %v2107 = vmul.f32 %v2064, 1.442695
      %v2108 = vpow.pop %v2107
      %v2109 = vmul.f32 %v2065, 1.442695
      %v2110 = vpow.pop %v2109
      %v2111 = vmul.f32 %v2066, 1.442695
      %v2112 = vpow.pop %v2111
      %v2113 = vmul.f32 %v2067, 1.442695
      %v2114 = vpow.pop %v2113
      %v2115 = vmul.f32 %v2068, 1.442695
      %v2116 = vpow.pop %v2115
      %v2117 = vmul.f32 %v2069, 1.442695
      %v2118 = vpow.pop %v2117
      %v2119 = vmul.f32 %v2070, 1.442695
      %v2120 = vpow.pop %v2119
      %v2121 = vmul.f32 %v2071, 1.442695
      %v2122 = vpow.pop %v2121
      %v2123 = vmul.f32 %v2072, 1.442695
      %v2124 = vpow.pop %v2123
      %v2125 = vmul.f32 %v2073, 1.442695
      %v2126 = vpow.pop %v2125
      %v2127 = vmul.f32 %v2074, 1.442695
      %v2128 = vpow.pop %v2127
      %v2129 = vmul.f32 %v2075, 1.442695
      %v2130 = vpow.pop %v2129
      %v2131 = vmul.f32 %v2076, 1.442695
      %v2132 = vpow.pop %v2131
      %v2133 = vmul.f32 %v2077, 1.442695
      %v2134 = vpow.pop %v2133
      %v2135 = vmul.f32 %v2078, 1.442695
      %v2136 = vpow.pop %v2135
      %v2137 = vmul.f32 %v2079, 1.442695
      %v2138 = vpow.pop %v2137
      %v2139 = vmul.f32 %v2080, 1.442695
      %v2140 = vpow.pop %v2139
      %v2141 = vmul.f32 %v2081, 1.442695
      %v2142 = vpow.pop %v2141
      %v2143 = vmul.f32 %v2082, 1.442695
      %v2144 = vpow.pop %v2143
      %v2145 = vmul.f32 %v2083, 1.442695
      %v2146 = vpow.pop %v2145
      %v2147 = vmul.f32 %v2084, 1.442695
      %v2148 = vpow.pop %v2147
      %v2149 = vadd.f32 %v2086, 1.0
      %v2150 = vadd.f32 %v2088, 1.0
      %v2151 = vadd.f32 %v2090, 1.0
      %v2152 = vadd.f32 %v2092, 1.0
      %v2153 = vadd.f32 %v2094, 1.0
      %v2154 = vadd.f32 %v2096, 1.0
      %v2155 = vadd.f32 %v2098, 1.0
      %v2156 = vadd.f32 %v2100, 1.0
      %v2157 = vadd.f32 %v2102, 1.0
      %v2158 = vadd.f32 %v2104, 1.0
      %v2159 = vadd.f32 %v2106, 1.0
      %v2160 = vadd.f32 %v2108, 1.0
      %v2161 = vadd.f32 %v2110, 1.0
      %v2162 = vadd.f32 %v2112, 1.0
      %v2163 = vadd.f32 %v2114, 1.0
      %v2164 = vadd.f32 %v2116, 1.0
      %v2165 = vadd.f32 %v2118, 1.0
      %v2166 = vadd.f32 %v2120, 1.0
      %v2167 = vadd.f32 %v2122, 1.0
      %v2168 = vadd.f32 %v2124, 1.0
      %v2169 = vadd.f32 %v2126, 1.0
      %v2170 = vadd.f32 %v2128, 1.0
      %v2171 = vadd.f32 %v2130, 1.0
      %v2172 = vadd.f32 %v2132, 1.0
      %v2173 = vadd.f32 %v2134, 1.0
      %v2174 = vadd.f32 %v2136, 1.0
      %v2175 = vadd.f32 %v2138, 1.0
      %v2176 = vadd.f32 %v2140, 1.0
      %v2177 = vadd.f32 %v2142, 1.0
      %v2178 = vadd.f32 %v2144, 1.0
      %v2179 = vadd.f32 %v2146, 1.0
      %v2180 = vadd.f32 %v2148, 1.0
      %v2181 = vrcp.pop %v2149
      %v2182 = vrcp.pop %v2150
      %v2183 = vrcp.pop %v2151
      %v2184 = vrcp.pop %v2152
      %v2185 = vrcp.pop %v2153
      %v2186 = vrcp.pop %v2154
      %v2187 = vrcp.pop %v2155
      %v2188 = vrcp.pop %v2156
      %v2189 = vrcp.pop %v2157
      %v2190 = vrcp.pop %v2158
      %v2191 = vrcp.pop %v2159
      %v2192 = vrcp.pop %v2160
      %v2193 = vrcp.pop %v2161
      %v2194 = vrcp.pop %v2162
      %v2195 = vrcp.pop %v2163
      %v2196 = vrcp.pop %v2164
      %v2197 = vrcp.pop %v2165
      %v2198 = vrcp.pop %v2166
      %v2199 = vrcp.pop %v2167
      %v2200 = vrcp.pop %v2168
      %v2201 = vrcp.pop %v2169
      %v2202 = vrcp.pop %v2170
      %v2203 = vrcp.pop %v2171
      %v2204 = vrcp.pop %v2172
      %v2205 = vrcp.pop %v2173
      %v2206 = vrcp.pop %v2174
      %v2207 = vrcp.pop %v2175
      %v2208 = vrcp.pop %v2176
      %v2209 = vrcp.pop %v2177
      %v2210 = vrcp.pop %v2178
      %v2211 = vrcp.pop %v2179
      %v2212 = vrcp.pop %v2180
      %v2213 = vmul.f32 %v2021, %v2181
      %v2214 = vmul.f32 %v2022, %v2182
      %v2215 = vmul.f32 %v2023, %v2183
      %v2216 = vmul.f32 %v2024, %v2184
      %v2217 = vmul.f32 %v2025, %v2185
      %v2218 = vmul.f32 %v2026, %v2186
      %v2219 = vmul.f32 %v2027, %v2187
      %v2220 = vmul.f32 %v2028, %v2188
      %v2221 = vmul.f32 %v2029, %v2189
      %v2222 = vmul.f32 %v2030, %v2190
      %v2223 = vmul.f32 %v2031, %v2191
      %v2224 = vmul.f32 %v2032, %v2192
      %v2225 = vmul.f32 %v2033, %v2193
      %v2226 = vmul.f32 %v2034, %v2194
      %v2227 = vmul.f32 %v2035, %v2195
      %v2228 = vmul.f32 %v2036, %v2196
      %v2229 = vmul.f32 %v2037, %v2197
      %v2230 = vmul.f32 %v2038, %v2198
      %v2231 = vmul.f32 %v2039, %v2199
      %v2232 = vmul.f32 %v2040, %v2200
      %v2233 = vmul.f32 %v2041, %v2201
      %v2234 = vmul.f32 %v2042, %v2202
      %v2235 = vmul.f32 %v2043, %v2203
      %v2236 = vmul.f32 %v2044, %v2204
      %v2237 = vmul.f32 %v2045, %v2205
      %v2238 = vmul.f32 %v2046, %v2206
      %v2239 = vmul.f32 %v2047, %v2207
      %v2240 = vmul.f32 %v2048, %v2208
      %v2241 = vmul.f32 %v2049, %v2209
      %v2242 = vmul.f32 %v2050, %v2210
      %v2243 = vmul.f32 %v2051, %v2211
      %v2244 = vmul.f32 %v2052, %v2212
      %v2245 = vadd.f32 %v2213, %v280
      %v2246 = vadd.f32 %v2214, %v281
      %v2247 = vadd.f32 %v2215, %v282
      %v2248 = vadd.f32 %v2216, %v283
      %v2249 = vadd.f32 %v2217, %v284
      %v2250 = vadd.f32 %v2218, %v285
      %v2251 = vadd.f32 %v2219, %v286
      %v2252 = vadd.f32 %v2220, %v287
      %v2253 = vadd.f32 %v2221, %v288
      %v2254 = vadd.f32 %v2222, %v289
      %v2255 = vadd.f32 %v2223, %v290
      %v2256 = vadd.f32 %v2224, %v291
      %v2257 = vadd.f32 %v2225, %v292
      %v2258 = vadd.f32 %v2226, %v293
      %v2259 = vadd.f32 %v2227, %v294
      %v2260 = vadd.f32 %v2228, %v295
      %v2261 = vadd.f32 %v2229, %v296
      %v2262 = vadd.f32 %v2230, %v297
      %v2263 = vadd.f32 %v2231, %v298
      %v2264 = vadd.f32 %v2232, %v299
      %v2265 = vadd.f32 %v2233, %v300
      %v2266 = vadd.f32 %v2234, %v301
      %v2267 = vadd.f32 %v2235, %v302
      %v2268 = vadd.f32 %v2236, %v303
      %v2269 = vadd.f32 %v2237, %v304
      %v2270 = vadd.f32 %v2238, %v305
      %v2271 = vadd.f32 %v2239, %v306
      %v2272 = vadd.f32 %v2240, %v307
      %v2273 = vadd.f32 %v2241, %v308
      %v2274 = vadd.f32 %v2242, %v309
      %v2275 = vadd.f32 %v2243, %v310
      %v2276 = vadd.f32 %v2244, %v311
      %2277 = vst.msk [vmem:[%s278] sm:$0xff] %vm329, %v2245
      %2278 = vst.msk [vmem:[%s278 + $0x8] sm:$0xff] %vm329, %v2246
      %2279 = vst.msk [vmem:[%s278 + $0x10] sm:$0xff] %vm329, %v2247
      %2280 = vst.msk [vmem:[%s278 + $0x18] sm:$0xff] %vm329, %v2248
      %2281 = vst.msk [vmem:[%s278 + $0x20] sm:$0xff] %vm329, %v2249
      %2282 = vst.msk [vmem:[%s278 + $0x28] sm:$0xff] %vm329, %v2250
      %2283 = vst.msk [vmem:[%s278 + $0x30] sm:$0xff] %vm329, %v2251
      %2284 = vst.msk [vmem:[%s278 + $0x38] sm:$0xff] %vm329, %v2252
      %2285 = vst.msk [vmem:[%s278 + $0x40] sm:$0xff] %vm329, %v2253
      %2286 = vst.msk [vmem:[%s278 + $0x48] sm:$0xff] %vm329, %v2254
      %2287 = vst.msk [vmem:[%s278 + $0x50] sm:$0xff] %vm329, %v2255
      %2288 = vst.msk [vmem:[%s278 + $0x58] sm:$0xff] %vm329, %v2256
      %2289 = vst.msk [vmem:[%s278 + $0x60] sm:$0xff] %vm329, %v2257
      %2290 = vst.msk [vmem:[%s278 + $0x68] sm:$0xff] %vm329, %v2258
      %2291 = vst.msk [vmem:[%s278 + $0x70] sm:$0xff] %vm329, %v2259
      %2292 = vst.msk [vmem:[%s278 + $0x78] sm:$0xff] %vm329, %v2260
      %2293 = vst.msk [vmem:[%s278 + $0x80] sm:$0xff] %vm329, %v2261
      %2294 = vst.msk [vmem:[%s278 + $0x88] sm:$0xff] %vm329, %v2262
      %2295 = vst.msk [vmem:[%s278 + $0x90] sm:$0xff] %vm329, %v2263
      %2296 = vst.msk [vmem:[%s278 + $0x98] sm:$0xff] %vm329, %v2264
      %2297 = vst.msk [vmem:[%s278 + $0xa0] sm:$0xff] %vm329, %v2265
      %2298 = vst.msk [vmem:[%s278 + $0xa8] sm:$0xff] %vm329, %v2266
      %2299 = vst.msk [vmem:[%s278 + $0xb0] sm:$0xff] %vm329, %v2267
      %2300 = vst.msk [vmem:[%s278 + $0xb8] sm:$0xff] %vm329, %v2268
      %2301 = vst.msk [vmem:[%s278 + $0xc0] sm:$0xff] %vm329, %v2269
      %2302 = vst.msk [vmem:[%s278 + $0xc8] sm:$0xff] %vm329, %v2270
      %2303 = vst.msk [vmem:[%s278 + $0xd0] sm:$0xff] %vm329, %v2271
      %2304 = vst.msk [vmem:[%s278 + $0xd8] sm:$0xff] %vm329, %v2272
      %2305 = vst.msk [vmem:[%s278 + $0xe0] sm:$0xff] %vm329, %v2273
      %2306 = vst.msk [vmem:[%s278 + $0xe8] sm:$0xff] %vm329, %v2274
      %2307 = vst.msk [vmem:[%s278 + $0xf0] sm:$0xff] %vm329, %v2275
      %2308 = vst.msk [vmem:[%s278 + $0xf8] sm:$0xff] %vm329, %v2276
      %p2309 = scmp.lt.s32.totalorder %s18, 1
      %s2310 = scalar_select %p2309, %s18, 1
      %s2311 = smul.addr %s2310, 32
      %s2312 = smul.addr %s2311, 8
      %s2313 = scalar_lea.vmem %s7, %s2312
      // Predicated region
      $region49: #{tpu_custom_call.1} parent=47 // pred_check
        %p2314 = pneg %p188
      $region50: #{tpu_custom_call.1} parent=47 // pred_check_branch
        %2316 = sbr.rel (%p2314) target = $region52
      $region51: #{tpu_custom_call.1} parent=47 // pred_region
        _
      $region52: #{tpu_custom_call.1} parent=47 // pred_fallthru
        _
    $region48: #{tpu_custom_call.1} parent=5 // pred_fallthru
      _
    %p2317 = scmp.le.s32.totalorder 2, %s13
    // Predicated region
    $region53: #{tpu_custom_call.1} parent=5 // pred_check
      %p2318 = pneg %p2317
    $region54: #{tpu_custom_call.1} parent=5 // pred_check_branch
      %2320 = sbr.rel (%p2318) target = $region56
    $region55: #{tpu_custom_call.1} parent=5 // pred_region
      %s2321 = ssub.s32 %s13, 2
      // Predicated region
      $region57: #{tpu_custom_call.1} parent=55 // pred_check
        %p2322 = pneg %p194
      $region58: #{tpu_custom_call.1} parent=55 // pred_check_branch
        %2324 = sbr.rel (%p2322) target = $region60
      $region59: #{tpu_custom_call.1} parent=55 // pred_region
        %p2325 = scmp.lt.s32.totalorder %s19, 1
        %s2326 = scalar_select %p2325, %s19, 1
        %s2327 = smul.addr %s2326, 32
        %s2328 = smul.addr %s2327, 8
        %s2329 = scalar_lea.vmem %s7, %s2328
      $region60: #{tpu_custom_call.1} parent=55 // pred_fallthru
        _
    $region56: #{tpu_custom_call.1} parent=5 // pred_fallthru
      _
  $region6: #{tpu_custom_call.1} parent=0 // loop_footer
    %s17 = sadd.s32 1, %s13
  $region7: #{tpu_custom_call.1} parent=0 // loop_footer_branch
    %12 = sbr.rel target = $region3
  $region8: #{tpu_custom_call.1} parent=0 // loop_exit
    _

</llo_original>
